<compile_context>
chip_gen: v7x
topology: tpu7x:2x2x1
jax: 0.10.0
libtpu: 0.0.40
codegen_flags: <defaults>
</compile_context>

<pallas_src>
import jax
import jax.numpy as jnp
from jax.experimental import pallas as pl
from jax.experimental.pallas import tpu as pltpu


# ----------------------------- Pallas kernel --------------------------------
def yoga_gcn_kernel(a_ref, xw1_ref, pool_ref, wstack_ref, bstack_ref, out_ref):
    a = a_ref[...]            # (Nb, Nb) bf16 block-diag normalized adjacency
    b = bstack_ref[...]       # (5, H)   f32: b1..b4, bfc (classes lane-padded)

    # Layer 1: XW1 precomputed host-side -> relu(A @ XW1 + b1), f32 accumulate.
    h = jnp.maximum(
        jnp.dot(a, xw1_ref[...], preferred_element_type=jnp.float32) + b[0:1, :],
        0.0)

    # Layers 2..4: relu(A @ (H @ W) + b). Matmul inputs bf16, accumulate f32;
    # bias-add / ReLU stay in f32 (v5e VPU has no bf16 ALU).
    for i in range(3):
        xw = jnp.dot(h.astype(jnp.bfloat16), wstack_ref[i],
                     preferred_element_type=jnp.float32)
        h = jnp.maximum(
            jnp.dot(a, xw.astype(jnp.bfloat16),
                    preferred_element_type=jnp.float32) + b[i + 1:i + 2, :],
            0.0)

    # global_mean_pool for all Gb graphs of this block: (Gb, Nb) @ (Nb, H)
    pooled = jnp.dot(pool_ref[...].astype(jnp.bfloat16), h.astype(jnp.bfloat16),
                     preferred_element_type=jnp.float32)
    # fc head; wfc is wstack[3], classes lane-padded to H -> unmasked (Gb, 128) store
    out_ref[...] = jnp.dot(pooled.astype(jnp.bfloat16), wstack_ref[3],
                           preferred_element_type=jnp.float32) + b[4:5, :]


def yoga_gcn_pallas(a_blocks, xw1_flat, pool_mat, wstack, bstack, num_classes):
    """Batched YogaGCN forward: one block of Gb packed graphs per grid step."""
    nblk, n_blk, _ = a_blocks.shape
    B = pool_mat.shape[0]
    gb = B // nblk
    hidden = xw1_flat.shape[-1]
    c_pad = wstack.shape[-1]

    out = pl.pallas_call(
        yoga_gcn_kernel,
        out_shape=jax.ShapeDtypeStruct((B, c_pad), jnp.float32),
        grid=(nblk,),
        in_specs=[
            # per-block (grid-blocked) operands
            pl.BlockSpec((None, n_blk, n_blk), lambda g: (g, 0, 0)),   # A block-diag
            pl.BlockSpec((n_blk, hidden), lambda g: (g, 0)),           # XW1 rows
            pl.BlockSpec((gb, n_blk), lambda g: (g, 0)),               # pool rows
            # weights / biases: constant index_maps -> stay resident in VMEM
            pl.BlockSpec((4, hidden, hidden), lambda g: (0, 0, 0)),    # W2..W4, Wfc
            pl.BlockSpec((5, hidden), lambda g: (0, 0)),               # b1..b4, bfc
        ],
        out_specs=pl.BlockSpec((gb, c_pad), lambda g: (g, 0)),
        compiler_params=pltpu.CompilerParams(
            dimension_semantics=("parallel",)),
    )(a_blocks, xw1_flat, pool_mat, wstack, bstack)

    return out[:, :num_classes]


# ------------------------------- glue (JAX) ---------------------------------
def build_normalized_adjacency(edge_index, num_nodes):
    """A_hat = D^-1/2 (A + I) D^-1/2, messages flow src -> dst (PyG default)."""
    src, dst = edge_index[0], edge_index[1]
    a = jnp.zeros((num_nodes, num_nodes), jnp.float32)
    a = a.at[dst, src].add(1.0)
    a = a + jnp.eye(num_nodes, dtype=jnp.float32)          # self loops
    deg = jnp.sum(a, axis=1)
    dinv = jnp.where(deg > 0, jax.lax.rsqrt(deg), 0.0)
    return dinv[:, None] * a * dinv[None, :]


def build_pool_matrix(batch, num_graphs):
    """P[g, n] = 1 / |graph g| if batch[n] == g else 0  (global_mean_pool)."""
    onehot = (batch[None, :] == jnp.arange(num_graphs)[:, None]).astype(jnp.float32)
    counts = jnp.maximum(jnp.sum(onehot, axis=1, keepdims=True), 1.0)
    return onehot / counts


def reference_forward(a_hat, x, pool_mat, params):
    """Pure-JAX f32 reference on the flat (PyG-style) graph representation."""
    w1, b1, w2, b2, w3, b3, w4, b4, wfc, bfc = params
    h = x
    for w_, b_ in ((w1, b1), (w2, b2), (w3, b3), (w4, b4)):
        h = jnp.maximum(a_hat @ (h @ w_) + b_, 0.0)
    return (pool_mat @ h) @ wfc + bfc


# --------------------------------- main --------------------------------------
if __name__ == "__main__":
    key = jax.random.PRNGKey(0)
    kp, kx = jax.random.split(key)

    in_channels = 3
    hidden_dim = 128         # as in the PyTorch module (lane-dense)
    num_classes = 4
    c_pad = hidden_dim       # classes lane-padded so wfc folds into wstack
    n_pad = 16               # per-graph node padding
    gb = 8                   # graphs per block-diag tile -> 128-row MXU tiles
    node_counts = [16, 12, 16, 10, 14, 16, 9, 16,
                   11, 16, 13, 8, 16, 15, 16, 12]
    B = len(node_counts)
    assert B % gb == 0
    nblk = B // gb           # grid length (2 -> both v7x TensorCores busy)
    n_blk = gb * n_pad       # 128 (use 256 on v6e/v7x with larger batches)

    # ---------------- parameters (natural shapes) ----------------------------
    keys = jax.random.split(kp, 10)

    def lin(k, fan_in, fan_out):
        return (jax.random.normal(k, (fan_in, fan_out), jnp.float32)
                / jnp.sqrt(float(fan_in)))

    w1 = lin(keys[0], in_channels, hidden_dim)
    w2 = lin(keys[1], hidden_dim, hidden_dim)
    w3 = lin(keys[2], hidden_dim, hidden_dim)
    w4 = lin(keys[3], hidden_dim, hidden_dim)
    wfc = lin(keys[4], hidden_dim, num_classes)
    b1 = 0.05 * jax.random.normal(keys[5], (1, hidden_dim), jnp.float32)
    b2 = 0.05 * jax.random.normal(keys[6], (1, hidden_dim), jnp.float32)
    b3 = 0.05 * jax.random.normal(keys[7], (1, hidden_dim), jnp.float32)
    b4 = 0.05 * jax.random.normal(keys[8], (1, hidden_dim), jnp.float32)
    bfc = 0.05 * jax.random.normal(keys[9], (1, num_classes), jnp.float32)

    # ---------------- per-graph padded batch, packed into blocks --------------
    xkeys = jax.random.split(kx, B)
    a_blocks = jnp.zeros((nblk, n_blk, n_blk), jnp.float32)
    xw1_pad = jnp.zeros((B, n_pad, hidden_dim), jnp.float32)
    pool_mat = jnp.zeros((B, n_blk), jnp.float32)
    x_list, edge_list, batch_list = [], [], []
    node_offset = 0
    for g, n in enumerate(node_counts):
        # bidirectional chain within graph g
        i = jnp.arange(n - 1, dtype=jnp.int32)
        e = jnp.stack([jnp.concatenate([i, i + 1]),
                       jnp.concatenate([i + 1, i])])
        a_g = build_normalized_adjacency(e, n)
        x_g = jax.random.normal(xkeys[g], (n, in_channels), jnp.float32)

        blk, slot = g // gb, g % gb
        r0 = slot * n_pad
        a_blocks = a_blocks.at[blk, r0:r0 + n, r0:r0 + n].set(a_g)
        # Layer-1 XW precomputed host-side (tiny (n,3)@(3,128)); padded rows 0.
        xw1_pad = xw1_pad.at[g, :n, :].set(x_g @ w1)
        pool_mat = pool_mat.at[g, r0:r0 + n].set(1.0 / n)

        x_list.append(x_g)
        edge_list.append(e + node_offset)
        batch_list.append(jnp.full((n,), g, jnp.int32))
        node_offset += n

    # ---------------- packed / padded parameters for the kernel ---------------
    wfc_pad = jnp.zeros((hidden_dim, c_pad), jnp.float32).at[:, :num_classes].set(wfc)
    bfc_pad = jnp.zeros((1, c_pad), jnp.float32).at[:, :num_classes].set(bfc)
    wstack = jnp.stack([w2, w3, w4, wfc_pad]).astype(jnp.bfloat16)     # (4, H, H)
    bstack = jnp.concatenate([b1, b2, b3, b4, bfc_pad], axis=0)        # (5, H) f32

    a_blocks_bf16 = a_blocks.astype(jnp.bfloat16)
    xw1_flat = xw1_pad.reshape(B * n_pad, hidden_dim).astype(jnp.bfloat16)

    out = yoga_gcn_pallas(a_blocks_bf16, xw1_flat, pool_mat, wstack, bstack,
                          num_classes)
    out = jax.block_until_ready(out)

    # ---------------- reference: flat PyG-style f32 formulation ---------------
    x_flat = jnp.concatenate(x_list, axis=0)
    edge_index = jnp.concatenate(edge_list, axis=1)
    batch = jnp.concatenate(batch_list, axis=0)
    total_nodes = int(node_offset)
    a_hat = build_normalized_adjacency(edge_index, total_nodes)
    pool_ref_mat = build_pool_matrix(batch, B)
    ref = reference_forward(a_hat, x_flat, pool_ref_mat,
                            (w1, b1, w2, b2, w3, b3, w4, b4, wfc, bfc))

    assert out.shape == (B, num_classes)
    # bf16 matmul inputs with f32 accumulation over 4 chained layers: allow a
    # bf16-appropriate tolerance against the pure-f32 reference.
    assert jnp.allclose(out, ref, atol=5e-2, rtol=5e-2), (out, ref)

    print("KERNEL_OK")
</pallas_src>

<mosaic_0001>
module attributes {stable_mosaic.version = 11 : i64} {
  func.func @yoga_gcn_kernel(%arg0: i32, %arg1: memref<1x128x128xbf16, #tpu.memory_space<vmem>>, %arg2: memref<128x128xbf16, #tpu.memory_space<vmem>>, %arg3: memref<8x128xf32, #tpu.memory_space<vmem>>, %arg4: memref<4x128x128xbf16, #tpu.memory_space<vmem>>, %arg5: memref<5x128xf32, #tpu.memory_space<vmem>>, %arg6: memref<8x128xf32, #tpu.memory_space<vmem>>) attributes {dimension_semantics = [#tpu.dimension_semantics<parallel>], iteration_bounds = array<i64: 2>, scalar_prefetch = 0 : i64, scratch_operands = 0 : i64, tpu.core_type = #tpu.core_type<tc>, window_params = [{transform_indices = @transform_0, window_bounds = array<i64: 1, 128, 128>}, {transform_indices = @transform_1, window_bounds = array<i64: 128, 128>}, {transform_indices = @transform_2, window_bounds = array<i64: 8, 128>}, {pipeline_mode = #tpu.pipeline_mode<synchronous>, transform_indices = @transform_3, window_bounds = array<i64: 4, 128, 128>}, {pipeline_mode = #tpu.pipeline_mode<synchronous>, transform_indices = @transform_4, window_bounds = array<i64: 5, 128>}, {transform_indices = @transform_5, window_bounds = array<i64: 8, 128>}]} {
    %c0 = arith.constant 0 : index
    %c0_0 = arith.constant 0 : index
    %c0_1 = arith.constant 0 : index
    %0 = vector.load %arg1[%c0, %c0_0, %c0_1] : memref<1x128x128xbf16, #tpu.memory_space<vmem>>, vector<1x128x128xbf16>
    %1 = vector.shape_cast %0 : vector<1x128x128xbf16> to vector<128x128xbf16>
    %c0_2 = arith.constant 0 : index
    %c0_3 = arith.constant 0 : index
    %2 = vector.load %arg5[%c0_2, %c0_3] : memref<5x128xf32, #tpu.memory_space<vmem>>, vector<5x128xf32>
    %c0_4 = arith.constant 0 : index
    %c0_5 = arith.constant 0 : index
    %3 = vector.load %arg2[%c0_4, %c0_5] : memref<128x128xbf16, #tpu.memory_space<vmem>>, vector<128x128xbf16>
    %cst = arith.constant dense<0.000000e+00> : vector<128x128xf32>
    %4 = tpu.matmul %1, %3, %cst {dimension_numbers = #tpu.dot_dimension_numbers<[1], [0], [0], [1], [0, 0, 1, 1], [], []>} : vector<128x128xbf16>, vector<128x128xbf16>, vector<128x128xf32> -> vector<128x128xf32>
    %5 = vector.extract_strided_slice %2 {offsets = [0, 0], sizes = [1, 128], strides = [1, 1]} : vector<5x128xf32> to vector<1x128xf32>
    %6 = vector.broadcast %5 : vector<1x128xf32> to vector<128x128xf32>
    %7 = arith.addf %4, %6 : vector<128x128xf32>
    %cst_6 = arith.constant 0.000000e+00 : f32
    %8 = vector.broadcast %cst_6 : f32 to vector<128x128xf32>
    %9 = arith.maximumf %7, %8 : vector<128x128xf32>
    %10 = arith.truncf %9 : vector<128x128xf32> to vector<128x128xbf16>
    %c0_7 = arith.constant 0 : index
    %c0_8 = arith.constant 0 : index
    %c0_9 = arith.constant 0 : index
    %11 = vector.load %arg4[%c0_7, %c0_8, %c0_9] : memref<4x128x128xbf16, #tpu.memory_space<vmem>>, vector<1x128x128xbf16>
    %12 = vector.shape_cast %11 : vector<1x128x128xbf16> to vector<128x128xbf16>
    %cst_10 = arith.constant dense<0.000000e+00> : vector<128x128xf32>
    %13 = tpu.matmul %10, %12, %cst_10 {dimension_numbers = #tpu.dot_dimension_numbers<[1], [0], [0], [1], [0, 0, 1, 1], [], []>} : vector<128x128xbf16>, vector<128x128xbf16>, vector<128x128xf32> -> vector<128x128xf32>
    %14 = arith.truncf %13 : vector<128x128xf32> to vector<128x128xbf16>
    %cst_11 = arith.constant dense<0.000000e+00> : vector<128x128xf32>
    %15 = tpu.matmul %1, %14, %cst_11 {dimension_numbers = #tpu.dot_dimension_numbers<[1], [0], [0], [1], [0, 0, 1, 1], [], []>} : vector<128x128xbf16>, vector<128x128xbf16>, vector<128x128xf32> -> vector<128x128xf32>
    %16 = vector.extract_strided_slice %2 {offsets = [1, 0], sizes = [1, 128], strides = [1, 1]} : vector<5x128xf32> to vector<1x128xf32>
    %17 = vector.broadcast %16 : vector<1x128xf32> to vector<128x128xf32>
    %18 = arith.addf %15, %17 : vector<128x128xf32>
    %cst_12 = arith.constant 0.000000e+00 : f32
    %19 = vector.broadcast %cst_12 : f32 to vector<128x128xf32>
    %20 = arith.maximumf %18, %19 : vector<128x128xf32>
    %21 = arith.truncf %20 : vector<128x128xf32> to vector<128x128xbf16>
    %c1 = arith.constant 1 : index
    %c0_13 = arith.constant 0 : index
    %c0_14 = arith.constant 0 : index
    %22 = vector.load %arg4[%c1, %c0_13, %c0_14] : memref<4x128x128xbf16, #tpu.memory_space<vmem>>, vector<1x128x128xbf16>
    %23 = vector.shape_cast %22 : vector<1x128x128xbf16> to vector<128x128xbf16>
    %cst_15 = arith.constant dense<0.000000e+00> : vector<128x128xf32>
    %24 = tpu.matmul %21, %23, %cst_15 {dimension_numbers = #tpu.dot_dimension_numbers<[1], [0], [0], [1], [0, 0, 1, 1], [], []>} : vector<128x128xbf16>, vector<128x128xbf16>, vector<128x128xf32> -> vector<128x128xf32>
    %25 = arith.truncf %24 : vector<128x128xf32> to vector<128x128xbf16>
    %cst_16 = arith.constant dense<0.000000e+00> : vector<128x128xf32>
    %26 = tpu.matmul %1, %25, %cst_16 {dimension_numbers = #tpu.dot_dimension_numbers<[1], [0], [0], [1], [0, 0, 1, 1], [], []>} : vector<128x128xbf16>, vector<128x128xbf16>, vector<128x128xf32> -> vector<128x128xf32>
    %27 = vector.extract_strided_slice %2 {offsets = [2, 0], sizes = [1, 128], strides = [1, 1]} : vector<5x128xf32> to vector<1x128xf32>
    %28 = vector.broadcast %27 : vector<1x128xf32> to vector<128x128xf32>
    %29 = arith.addf %26, %28 : vector<128x128xf32>
    %cst_17 = arith.constant 0.000000e+00 : f32
    %30 = vector.broadcast %cst_17 : f32 to vector<128x128xf32>
    %31 = arith.maximumf %29, %30 : vector<128x128xf32>
    %32 = arith.truncf %31 : vector<128x128xf32> to vector<128x128xbf16>
    %c2 = arith.constant 2 : index
    %c0_18 = arith.constant 0 : index
    %c0_19 = arith.constant 0 : index
    %33 = vector.load %arg4[%c2, %c0_18, %c0_19] : memref<4x128x128xbf16, #tpu.memory_space<vmem>>, vector<1x128x128xbf16>
    %34 = vector.shape_cast %33 : vector<1x128x128xbf16> to vector<128x128xbf16>
    %cst_20 = arith.constant dense<0.000000e+00> : vector<128x128xf32>
    %35 = tpu.matmul %32, %34, %cst_20 {dimension_numbers = #tpu.dot_dimension_numbers<[1], [0], [0], [1], [0, 0, 1, 1], [], []>} : vector<128x128xbf16>, vector<128x128xbf16>, vector<128x128xf32> -> vector<128x128xf32>
    %36 = arith.truncf %35 : vector<128x128xf32> to vector<128x128xbf16>
    %cst_21 = arith.constant dense<0.000000e+00> : vector<128x128xf32>
    %37 = tpu.matmul %1, %36, %cst_21 {dimension_numbers = #tpu.dot_dimension_numbers<[1], [0], [0], [1], [0, 0, 1, 1], [], []>} : vector<128x128xbf16>, vector<128x128xbf16>, vector<128x128xf32> -> vector<128x128xf32>
    %38 = vector.extract_strided_slice %2 {offsets = [3, 0], sizes = [1, 128], strides = [1, 1]} : vector<5x128xf32> to vector<1x128xf32>
    %39 = vector.broadcast %38 : vector<1x128xf32> to vector<128x128xf32>
    %40 = arith.addf %37, %39 : vector<128x128xf32>
    %cst_22 = arith.constant 0.000000e+00 : f32
    %41 = vector.broadcast %cst_22 : f32 to vector<128x128xf32>
    %42 = arith.maximumf %40, %41 : vector<128x128xf32>
    %c0_23 = arith.constant 0 : index
    %c0_24 = arith.constant 0 : index
    %43 = vector.load %arg3[%c0_23, %c0_24] : memref<8x128xf32, #tpu.memory_space<vmem>>, vector<8x128xf32>
    %44 = arith.truncf %43 : vector<8x128xf32> to vector<8x128xbf16>
    %45 = arith.truncf %42 : vector<128x128xf32> to vector<128x128xbf16>
    %cst_25 = arith.constant dense<0.000000e+00> : vector<8x128xf32>
    %46 = tpu.matmul %44, %45, %cst_25 {dimension_numbers = #tpu.dot_dimension_numbers<[1], [0], [0], [1], [0, 0, 1, 1], [], []>} : vector<8x128xbf16>, vector<128x128xbf16>, vector<8x128xf32> -> vector<8x128xf32>
    %47 = arith.truncf %46 : vector<8x128xf32> to vector<8x128xbf16>
    %c3 = arith.constant 3 : index
    %c0_26 = arith.constant 0 : index
    %c0_27 = arith.constant 0 : index
    %48 = vector.load %arg4[%c3, %c0_26, %c0_27] : memref<4x128x128xbf16, #tpu.memory_space<vmem>>, vector<1x128x128xbf16>
    %49 = vector.shape_cast %48 : vector<1x128x128xbf16> to vector<128x128xbf16>
    %cst_28 = arith.constant dense<0.000000e+00> : vector<8x128xf32>
    %50 = tpu.matmul %47, %49, %cst_28 {dimension_numbers = #tpu.dot_dimension_numbers<[1], [0], [0], [1], [0, 0, 1, 1], [], []>} : vector<8x128xbf16>, vector<128x128xbf16>, vector<8x128xf32> -> vector<8x128xf32>
    %51 = vector.extract_strided_slice %2 {offsets = [4, 0], sizes = [1, 128], strides = [1, 1]} : vector<5x128xf32> to vector<1x128xf32>
    %52 = vector.broadcast %51 : vector<1x128xf32> to vector<8x128xf32>
    %53 = arith.addf %50, %52 : vector<8x128xf32>
    %c0_29 = arith.constant 0 : index
    %c0_30 = arith.constant 0 : index
    %54 = vector.load %arg6[%c0_29, %c0_30] : memref<8x128xf32, #tpu.memory_space<vmem>>, vector<8x128xf32>
    tpu.vector_store %arg6[%c0_29, %c0_30], %53 {strides = array<i32>} : memref<8x128xf32, #tpu.memory_space<vmem>>, vector<8x128xf32>,
    return
  }
  func.func @transform_0(%arg0: i32) -> (i32, i32, i32) {
    %c0_i32 = arith.constant 0 : i32
    %c0_i32_0 = arith.constant 0 : i32
    %c0_i32_1 = arith.constant 0 : i32
    return %arg0, %c0_i32, %c0_i32_0 : i32, i32, i32
  }
  func.func @transform_1(%arg0: i32) -> (i32, i32) {
    %c0_i32 = arith.constant 0 : i32
    %c0_i32_0 = arith.constant 0 : i32
    return %arg0, %c0_i32 : i32, i32
  }
  func.func @transform_2(%arg0: i32) -> (i32, i32) {
    %c0_i32 = arith.constant 0 : i32
    %c0_i32_0 = arith.constant 0 : i32
    return %arg0, %c0_i32 : i32, i32
  }
  func.func @transform_3(%arg0: i32) -> (i32, i32, i32) {
    %c0_i32 = arith.constant 0 : i32
    %c0_i32_0 = arith.constant 0 : i32
    %c0_i32_1 = arith.constant 0 : i32
    %c0_i32_2 = arith.constant 0 : i32
    return %c0_i32, %c0_i32_0, %c0_i32_1 : i32, i32, i32
  }
  func.func @transform_4(%arg0: i32) -> (i32, i32) {
    %c0_i32 = arith.constant 0 : i32
    %c0_i32_0 = arith.constant 0 : i32
    %c0_i32_1 = arith.constant 0 : i32
    return %c0_i32, %c0_i32_0 : i32, i32
  }
  func.func @transform_5(%arg0: i32) -> (i32, i32) {
    %c0_i32 = arith.constant 0 : i32
    %c0_i32_0 = arith.constant 0 : i32
    return %arg0, %c0_i32 : i32, i32
  }
}

</mosaic_0001>

<llo_original>
// kernel: tpu_custom_call.1
$region0: #{tpu_custom_call.1}
  #allocation0 [shape = 'u32[]', space=smem, size = 0x4, offset = 0x4, fixed_abs, tag = 'smem constant byte address 0x4 - core index']
  #allocation1 [shape = 'u32[144,128]{1,0:T(1,128)}', space=vmem, size = 0x12000, scoped, tag = 'internal scratch']
  %s0 = inlined_call_operand.hbm [shape: bf16[2,128,128], index: 0, kind: input, shape index: {}]
  %s1 = inlined_call_operand.hbm [shape: bf16[256,128], index: 1, kind: input, shape index: {}]
  %s2 = inlined_call_operand.hbm [shape: f32[16,128], index: 2, kind: input, shape index: {}]
  %s3 = inlined_call_operand.hbm [shape: bf16[4,128,128], index: 3, kind: input, shape index: {}]
  %s4 = inlined_call_operand.vmem [shape: f32[5,128], index: 4, kind: input, shape index: {}]
  %s5 = inlined_call_operand.hbm [shape: f32[16,128], index: 5, kind: output, shape index: {}]
  %s6 = sld [smem:[#allocation0]]
  $region69: #{tpu_custom_call.1} parent=0
    _
  %s8 = ssub.s32 1, %s6
  %s9 = scalar_select 0, %s8, %s6
  $region1: #{tpu_custom_call.1} parent=0
    #allocation2 [shape = 'u8[65536]{0}', space=vmem, size = 0x10000, scoped, tag = 'input window, operand 0']
    #allocation3 [shape = 's32[2]{0}', space=sflag, size = 0x8, scoped, tag = 'scoped memory for tpu_custom_call.1']
    #allocation4 [shape = 's32[2]{0}', space=sflag, size = 0x8, scoped, tag = 'scoped memory for tpu_custom_call.1']
    #allocation5 [shape = 'u8[65536]{0}', space=vmem, size = 0x10000, scoped, tag = 'input window, operand 1']
    #allocation6 [shape = 's32[2]{0}', space=sflag, size = 0x8, scoped, tag = 'scoped memory for tpu_custom_call.1']
    #allocation7 [shape = 'u8[8192]{0}', space=vmem, size = 0x2000, scoped, tag = 'input window, operand 2']
    #allocation8 [shape = 'u8[131072]{0}', space=vmem, size = 0x20000, scoped, tag = 'input window, operand 3, single buffered']
    #allocation9 [shape = 's32[1]{0}', space=sflag, size = 0x4, scoped, tag = 'scoped memory for tpu_custom_call.1']
    #allocation10 [shape = 'u8[8192]{0}', space=vmem, size = 0x2000, scoped, tag = 'output window, operand 0']
    %10 = vsyncpa [#allocation3], 0
    %s11 = scalar_lea.sflag [#allocation3], 1
    %12 = vsyncpa %s11, 0
    %13 = vsyncpa [#allocation6], 0
    %s14 = scalar_lea.sflag [#allocation6], 1
    %15 = vsyncpa %s14, 0
    %16 = vsyncpa [#allocation9], 0
    %17 = vsyncpa [#allocation4], 0
    %s18 = scalar_lea.sflag [#allocation4], 1
    %19 = vsyncpa %s18, 0
    loop: start=0, step=1, limit=4
    $region2: #{tpu_custom_call.1} parent=1 // loop_pre_header
      _
    $region3: #{tpu_custom_call.1} parent=1 // loop_header
      %s21 = sphi 0, %s25
      %p22 = scmp.ge.s32.totalorder %s21, 4
      %s31 = sphi 0, %s33
      %s34 = sphi 0, %s31
      %s35 = sphi 0, %s34
      %s51 = sphi 0, %s35
      %s57 = sphi 0, %s59
      %s60 = sphi 0, %s57
      %s61 = sphi 0, %s60
      %s77 = sphi 0, %s61
      %s83 = sphi 0, %s85
      %s86 = sphi 0, %s83
      %s87 = sphi 0, %s86
      %s103 = sphi 0, %s87
      %s107 = sphi 0, %s107
      %s109 = sphi 0, %s107
      %s110 = sphi 0, %s109
      %s124 = sphi 0, %s110
      %s128 = sphi 0, %s128
      %s130 = sphi 0, %s128
      %s131 = sphi 0, %s130
      %s145 = sphi 0, %s131
      %s151 = sphi 0, %s153
      %s154 = sphi 0, %s151
      %s155 = sphi 0, %s154
      %s171 = sphi 0, %s155
    $region4: #{tpu_custom_call.1} parent=1 // loop_header_branch
      %24 = sbr.rel (%p22) target = $region8
    $region5: #{tpu_custom_call.1} parent=1 // loop_body
      %s26 = ssub.s32 %s21, 1
      %s27 = ssub.s32 %s21, 2
      %s28 = sadd.s32 %s21, 1
      %s29 = ssub.s32 %s21, %s28
      %p30 = scmp.eq.s32.totalorder %s29, 0
      %s32 = sadd.s32 %s31, 1
      %s33 = scalar_select %p30, %s31, %s32
      %p36 = pneg %p30
      %p37 = scmp.eq.s32.totalorder %s21, 1
      %p38 = por %p36, %p37
      %p39 = scmp.ne.s32.totalorder %s31, %s34
      %p40 = scmp.eq.s32.totalorder %s21, 0
      %p41 = por %p39, %p40
      %p42 = scmp.ne.s32.totalorder %s31, %s34
      %p43 = scmp.eq.s32.totalorder %s26, 1
      %p44 = por %p42, %p43
      %p45 = scmp.ne.s32.totalorder %s34, %s35
      %p46 = scmp.eq.s32.totalorder %s26, 0
      %p47 = por %p45, %p46
      %p48 = scmp.ne.s32.totalorder %s34, %s35
      %p49 = scmp.eq.s32.totalorder %s27, 1
      %p50 = por %p48, %p49
      %p52 = scmp.ne.s32.totalorder %s35, %s51
      %p53 = scmp.eq.s32.totalorder %s27, 0
      %p54 = por %p52, %p53
      %s55 = ssub.s32 %s21, %s28
      %p56 = scmp.eq.s32.totalorder %s55, 0
      %s58 = sadd.s32 %s57, 1
      %s59 = scalar_select %p56, %s57, %s58
      %p62 = pneg %p56
      %p63 = scmp.eq.s32.totalorder %s21, 1
      %p64 = por %p62, %p63
      %p65 = scmp.ne.s32.totalorder %s57, %s60
      %p66 = scmp.eq.s32.totalorder %s21, 0
      %p67 = por %p65, %p66
      %p68 = scmp.ne.s32.totalorder %s57, %s60
      %p69 = scmp.eq.s32.totalorder %s26, 1
      %p70 = por %p68, %p69
      %p71 = scmp.ne.s32.totalorder %s60, %s61
      %p72 = scmp.eq.s32.totalorder %s26, 0
      %p73 = por %p71, %p72
      %p74 = scmp.ne.s32.totalorder %s60, %s61
      %p75 = scmp.eq.s32.totalorder %s27, 1
      %p76 = por %p74, %p75
      %p78 = scmp.ne.s32.totalorder %s61, %s77
      %p79 = scmp.eq.s32.totalorder %s27, 0
      %p80 = por %p78, %p79
      %s81 = ssub.s32 %s21, %s28
      %p82 = scmp.eq.s32.totalorder %s81, 0
      %s84 = sadd.s32 %s83, 1
      %s85 = scalar_select %p82, %s83, %s84
      %p88 = pneg %p82
      %p89 = scmp.eq.s32.totalorder %s21, 1
      %p90 = por %p88, %p89
      %p91 = scmp.ne.s32.totalorder %s83, %s86
      %p92 = scmp.eq.s32.totalorder %s21, 0
      %p93 = por %p91, %p92
      %p94 = scmp.ne.s32.totalorder %s83, %s86
      %p95 = scmp.eq.s32.totalorder %s26, 1
      %p96 = por %p94, %p95
      %p97 = scmp.ne.s32.totalorder %s86, %s87
      %p98 = scmp.eq.s32.totalorder %s26, 0
      %p99 = por %p97, %p98
      %p100 = scmp.ne.s32.totalorder %s86, %s87
      %p101 = scmp.eq.s32.totalorder %s27, 1
      %p102 = por %p100, %p101
      %p104 = scmp.ne.s32.totalorder %s87, %s103
      %p105 = scmp.eq.s32.totalorder %s27, 0
      %p106 = por %p104, %p105
      %s108 = sadd.s32 %s107, 1
      %p111 = scmp.eq.s32.totalorder %s21, 1
      %p112 = scmp.ne.s32.totalorder %s107, %s109
      %p113 = scmp.eq.s32.totalorder %s21, 0
      %p114 = por %p112, %p113
      %p115 = scmp.ne.s32.totalorder %s107, %s109
      %p116 = scmp.eq.s32.totalorder %s26, 1
      %p117 = por %p115, %p116
      %p118 = scmp.ne.s32.totalorder %s109, %s110
      %p119 = scmp.eq.s32.totalorder %s26, 0
      %p120 = por %p118, %p119
      %p121 = scmp.ne.s32.totalorder %s109, %s110
      %p122 = scmp.eq.s32.totalorder %s27, 1
      %p123 = por %p121, %p122
      %p125 = scmp.ne.s32.totalorder %s110, %s124
      %p126 = scmp.eq.s32.totalorder %s27, 0
      %p127 = por %p125, %p126
      %s129 = sadd.s32 %s128, 1
      %p132 = scmp.eq.s32.totalorder %s21, 1
      %p133 = scmp.ne.s32.totalorder %s128, %s130
      %p134 = scmp.eq.s32.totalorder %s21, 0
      %p135 = por %p133, %p134
      %p136 = scmp.ne.s32.totalorder %s128, %s130
      %p137 = scmp.eq.s32.totalorder %s26, 1
      %p138 = por %p136, %p137
      %p139 = scmp.ne.s32.totalorder %s130, %s131
      %p140 = scmp.eq.s32.totalorder %s26, 0
      %p141 = por %p139, %p140
      %p142 = scmp.ne.s32.totalorder %s130, %s131
      %p143 = scmp.eq.s32.totalorder %s27, 1
      %p144 = por %p142, %p143
      %p146 = scmp.ne.s32.totalorder %s131, %s145
      %p147 = scmp.eq.s32.totalorder %s27, 0
      %p148 = por %p146, %p147
      %s149 = ssub.s32 %s21, %s28
      %p150 = scmp.eq.s32.totalorder %s149, 0
      %s152 = sadd.s32 %s151, 1
      %s153 = scalar_select %p150, %s151, %s152
      %p156 = pneg %p150
      %p157 = scmp.eq.s32.totalorder %s21, 1
      %p158 = por %p156, %p157
      %p159 = scmp.ne.s32.totalorder %s151, %s154
      %p160 = scmp.eq.s32.totalorder %s21, 0
      %p161 = por %p159, %p160
      %p162 = scmp.ne.s32.totalorder %s151, %s154
      %p163 = scmp.eq.s32.totalorder %s26, 1
      %p164 = por %p162, %p163
      %p165 = scmp.ne.s32.totalorder %s154, %s155
      %p166 = scmp.eq.s32.totalorder %s26, 0
      %p167 = por %p165, %p166
      %p168 = scmp.ne.s32.totalorder %s154, %s155
      %p169 = scmp.eq.s32.totalorder %s27, 1
      %p170 = por %p168, %p169
      %p172 = scmp.ne.s32.totalorder %s155, %s171
      %p173 = scmp.eq.s32.totalorder %s27, 0
      %p174 = por %p172, %p173
      %p175 = scmp.le.s32.totalorder 1, %s21
      %p176 = scmp.lt.s32.totalorder %s21, 3
      %p177 = pnand %p175, %p176
      %p178 = pneg %p177
      // Predicated region
      $region9: #{tpu_custom_call.1} parent=5 // pred_check
        _
      $region10: #{tpu_custom_call.1} parent=5 // pred_check_branch
        %180 = sbr.rel (%p177) target = $region12
      $region11: #{tpu_custom_call.1} parent=5 // pred_region
        %s181 = ssub.s32 %s21, 1
        // Predicated region
        $region13: #{tpu_custom_call.1} parent=11 // pred_check
          %p182 = pneg %p120
        $region14: #{tpu_custom_call.1} parent=11 // pred_check_branch
          %184 = sbr.rel (%p182) target = $region16
        $region15: #{tpu_custom_call.1} parent=11 // pred_region
          %s186 = ssub.s32 4096, 4096
          %187 = vsyncadd [#allocation9], %s186
          %s188 = sshll.u32 [#allocation8], 4
          %s189 = int_to_ptr.vmem [resolvable:$true] %s188
          %194 = dma.hbm_to_vmem [thread:$0]  %s3, 4096, %s189, [#allocation9], 64, 64, 4
        $region16: #{tpu_custom_call.1} parent=11 // pred_fallthru
          _
        // Predicated region
        $region17: #{tpu_custom_call.1} parent=11 // pred_check
          %p195 = pneg %p141
        $region18: #{tpu_custom_call.1} parent=11 // pred_check_branch
          %197 = sbr.rel (%p195) target = $region20
        $region19: #{tpu_custom_call.1} parent=11 // pred_region
          _
        $region20: #{tpu_custom_call.1} parent=11 // pred_fallthru
          _
      $region12: #{tpu_custom_call.1} parent=5 // pred_fallthru
        _
      %p198 = scmp.lt.s32.totalorder %s21, 2
      // Predicated region
      $region21: #{tpu_custom_call.1} parent=5 // pred_check
        %p199 = pneg %p198
      $region22: #{tpu_custom_call.1} parent=5 // pred_check_branch
        %201 = sbr.rel (%p199) target = $region24
      $region23: #{tpu_custom_call.1} parent=5 // pred_region
        // Predicated region
        $region25: #{tpu_custom_call.1} parent=23 // pred_check
          %p202 = pneg %p41
        $region26: #{tpu_custom_call.1} parent=23 // pred_check_branch
          %204 = sbr.rel (%p202) target = $region28
        $region27: #{tpu_custom_call.1} parent=23 // pred_region
          %s205 = sand.u32 %s31, 1
          %s206 = scalar_lea.sflag [#allocation3], %s205
          %s207 = sand.u32 %s31, 1
          %s208 = smul.addr %s207, 64
          %s209 = scalar_lea.vmem [#allocation2], %s208
          %s211 = ssub.s32 1024, 1024
          %212 = vsyncadd %s206, %s211
          %s213 = smul.addr %s21, 16
          %s214 = smul.addr %s213, 64
          %s215 = scalar_lea.hbm %s0, %s214
          %s216 = sshll.u32 %s209, 4
          %s217 = int_to_ptr.vmem [resolvable:$true] %s216
          %222 = dma.hbm_to_vmem [thread:$0]  %s215, 1024, %s217, %s206, 64, 64, 4
        $region28: #{tpu_custom_call.1} parent=23 // pred_fallthru
          _
        // Predicated region
        $region29: #{tpu_custom_call.1} parent=23 // pred_check
          %p223 = pneg %p67
        $region30: #{tpu_custom_call.1} parent=23 // pred_check_branch
          %225 = sbr.rel (%p223) target = $region32
        $region31: #{tpu_custom_call.1} parent=23 // pred_region
          %s226 = sand.u32 %s21, 1
          %s227 = scalar_lea.sflag [#allocation6], %s226
          %s228 = sand.u32 %s57, 1
          %s229 = smul.addr %s228, 64
          %s230 = scalar_lea.vmem [#allocation5], %s229
          %s231 = smul.u32 16, %s21
          %s233 = ssub.s32 1024, 1024
          %234 = vsyncadd %s227, %s233
          %s235 = smul.addr %s231, 64
          %s236 = scalar_lea.hbm %s1, %s235
          %s237 = sshll.u32 %s230, 4
          %s238 = int_to_ptr.vmem [resolvable:$true] %s237
          %243 = dma.hbm_to_vmem [thread:$0]  %s236, 1024, %s238, %s227, 64, 64, 4
        $region32: #{tpu_custom_call.1} parent=23 // pred_fallthru
          _
        // Predicated region
        $region33: #{tpu_custom_call.1} parent=23 // pred_check
          %p244 = pneg %p93
        $region34: #{tpu_custom_call.1} parent=23 // pred_check_branch
          %246 = sbr.rel (%p244) target = $region36
        $region35: #{tpu_custom_call.1} parent=23 // pred_region
          %s247 = sand.u32 %s21, 1
          %s248 = scalar_lea.sflag [#allocation6], %s247
          %s249 = sand.u32 %s83, 1
          %s250 = smul.addr %s249, 8
          %s251 = scalar_lea.vmem [#allocation7], %s250
          %s253 = ssub.s32 128, 128
          %254 = vsyncadd %s248, %s253
          %s255 = smul.addr %s21, 128
          %s256 = scalar_lea.hbm %s2, %s255
          %s258 = sshll.u32 %s251, 4
          %s259 = int_to_ptr.vmem [resolvable:$true] %s258
          %261 = dma.hbm_to_vmem [thread:$0]  %s256, 128, %s259, %s248
        $region36: #{tpu_custom_call.1} parent=23 // pred_fallthru
          _
      $region24: #{tpu_custom_call.1} parent=5 // pred_fallthru
        _
      %p262 = scmp.le.s32.totalorder 1, %s21
      %p263 = scmp.lt.s32.totalorder %s21, 3
      %p264 = pnand %p262, %p263
      %p265 = pneg %p264
      // Predicated region
      $region37: #{tpu_custom_call.1} parent=5 // pred_check
        _
      $region38: #{tpu_custom_call.1} parent=5 // pred_check_branch
        %267 = sbr.rel (%p264) target = $region40
      $region39: #{tpu_custom_call.1} parent=5 // pred_region
        %s268 = ssub.s32 %s21, 1
        %s269 = sand.u32 %s34, 1
        %s270 = scalar_lea.sflag [#allocation3], %s269
        %s271 = sand.u32 %s34, 1
        %s272 = smul.addr %s271, 64
        %s273 = scalar_lea.vmem [#allocation2], %s272
        // Predicated region
        $region41: #{tpu_custom_call.1} parent=39 // pred_check
          %p274 = pneg %p47
        $region42: #{tpu_custom_call.1} parent=39 // pred_check_branch
          %276 = sbr.rel (%p274) target = $region44
        $region43: #{tpu_custom_call.1} parent=39 // pred_region
          %277 = dma.done %s270, 1024
        $region44: #{tpu_custom_call.1} parent=39 // pred_fallthru
          _
        %s278 = sand.u32 %s26, 1
        %s279 = scalar_lea.sflag [#allocation6], %s278
        %s280 = sand.u32 %s60, 1
        %s281 = smul.addr %s280, 64
        %s282 = scalar_lea.vmem [#allocation5], %s281
        // Predicated region
        $region45: #{tpu_custom_call.1} parent=39 // pred_check
          %p283 = pneg %p73
        $region46: #{tpu_custom_call.1} parent=39 // pred_check_branch
          %285 = sbr.rel (%p283) target = $region48
        $region47: #{tpu_custom_call.1} parent=39 // pred_region
          %286 = dma.done %s279, 1024
        $region48: #{tpu_custom_call.1} parent=39 // pred_fallthru
          _
        %s287 = sand.u32 %s26, 1
        %s288 = scalar_lea.sflag [#allocation6], %s287
        %s289 = sand.u32 %s86, 1
        %s290 = smul.addr %s289, 8
        %s291 = scalar_lea.vmem [#allocation7], %s290
        // Predicated region
        $region49: #{tpu_custom_call.1} parent=39 // pred_check
          %p292 = pneg %p99
        $region50: #{tpu_custom_call.1} parent=39 // pred_check_branch
          %294 = sbr.rel (%p292) target = $region52
        $region51: #{tpu_custom_call.1} parent=39 // pred_region
          %295 = dma.done %s288, 128
        $region52: #{tpu_custom_call.1} parent=39 // pred_fallthru
          _
        // Predicated region
        $region53: #{tpu_custom_call.1} parent=39 // pred_check
          %p296 = pneg %p120
        $region54: #{tpu_custom_call.1} parent=39 // pred_check_branch
          %298 = sbr.rel (%p296) target = $region56
        $region55: #{tpu_custom_call.1} parent=39 // pred_region
          %299 = dma.done [#allocation9], 4096
        $region56: #{tpu_custom_call.1} parent=39 // pred_fallthru
          _
        %s300 = sand.u32 %s34, 1
        %s301 = scalar_lea.sflag [#allocation3], %s300
        %s302 = sand.u32 %s34, 1
        %s303 = smul.addr %s302, 64
        %s304 = scalar_lea.vmem [#allocation2], %s303
        %p305 = pneg %p47
        %p306 = pneg %p44
        %s307 = sand.u32 %s26, 1
        %s308 = scalar_lea.sflag [#allocation6], %s307
        %s309 = sand.u32 %s60, 1
        %s310 = smul.addr %s309, 64
        %s311 = scalar_lea.vmem [#allocation5], %s310
        %p312 = pneg %p73
        %p313 = pneg %p70
        %s314 = sand.u32 %s26, 1
        %s315 = scalar_lea.sflag [#allocation6], %s314
        %s316 = sand.u32 %s86, 1
        %s317 = smul.addr %s316, 8
        %s318 = scalar_lea.vmem [#allocation7], %s317
        %p319 = pneg %p99
        %p320 = pneg %p96
        %p321 = pneg %p120
        %p322 = pneg %p117
        %p323 = pneg %p141
        %p324 = pneg %p138
        %p325 = pneg %p167
        %p326 = pneg %p164
        %s327 = sand.u32 %s154, 1
        %s328 = scalar_lea.sflag [#allocation4], %s327
        %s329 = sand.u32 %s154, 1
        %s330 = smul.addr %s329, 8
        %s331 = scalar_lea.vmem [#allocation10], %s330
        %s332 = smul.u32 16, %s26
        %v334 = vld [vmem:[%s273] sm:$0xf]
        %v335 = vld [vmem:[%s273 + $0x4] sm:$0xf]
        %v336 = vld [vmem:[%s273 + $0x8] sm:$0xf]
        %v337 = vld [vmem:[%s273 + $0xc] sm:$0xf]
        %v338 = vld [vmem:[%s273 + $0x10] sm:$0xf]
        %v339 = vld [vmem:[%s273 + $0x14] sm:$0xf]
        %v340 = vld [vmem:[%s273 + $0x18] sm:$0xf]
        %v341 = vld [vmem:[%s273 + $0x1c] sm:$0xf]
        %v342 = vld [vmem:[%s273 + $0x20] sm:$0xf]
        %v343 = vld [vmem:[%s273 + $0x24] sm:$0xf]
        %v344 = vld [vmem:[%s273 + $0x28] sm:$0xf]
        %v345 = vld [vmem:[%s273 + $0x2c] sm:$0xf]
        %v346 = vld [vmem:[%s273 + $0x30] sm:$0xf]
        %v347 = vld [vmem:[%s273 + $0x34] sm:$0xf]
        %v348 = vld [vmem:[%s273 + $0x38] sm:$0xf]
        %v349 = vld [vmem:[%s273 + $0x3c] sm:$0xf]
        %v350 = vld [vmem:[%s4] sm:$0x1f]
        %v351 = vld [vmem:[%s282] sm:$0xf]
        %v352 = vld [vmem:[%s282 + $0x4] sm:$0xf]
        %v353 = vld [vmem:[%s282 + $0x8] sm:$0xf]
        %v354 = vld [vmem:[%s282 + $0xc] sm:$0xf]
        %v355 = vld [vmem:[%s282 + $0x10] sm:$0xf]
        %v356 = vld [vmem:[%s282 + $0x14] sm:$0xf]
        %v357 = vld [vmem:[%s282 + $0x18] sm:$0xf]
        %v358 = vld [vmem:[%s282 + $0x1c] sm:$0xf]
        %v359 = vld [vmem:[%s282 + $0x20] sm:$0xf]
        %v360 = vld [vmem:[%s282 + $0x24] sm:$0xf]
        %v361 = vld [vmem:[%s282 + $0x28] sm:$0xf]
        %v362 = vld [vmem:[%s282 + $0x2c] sm:$0xf]
        %v363 = vld [vmem:[%s282 + $0x30] sm:$0xf]
        %v364 = vld [vmem:[%s282 + $0x34] sm:$0xf]
        %v365 = vld [vmem:[%s282 + $0x38] sm:$0xf]
        %v366 = vld [vmem:[%s282 + $0x3c] sm:$0xf]
        %v367 = vlaneseq
        %v368 = vshrl.u32 %v367, 7
        %v369 = vsub.s32 0, %v368
        %v370 = vrot.slane %v350, %v369
        %v387 = vunpack.c.l.b16 %v334
        %v388 = vunpack.c.l.b16 %v335
        %v389 = vunpack.c.l.b16 %v336
        %v390 = vunpack.c.l.b16 %v337
        %v391 = vunpack.c.l.b16 %v338
        %v392 = vunpack.c.l.b16 %v339
        %v393 = vunpack.c.l.b16 %v340
        %v394 = vunpack.c.l.b16 %v341
        %v395 = vunpack.c.l.b16 %v342
        %v396 = vunpack.c.l.b16 %v343
        %v397 = vunpack.c.l.b16 %v344
        %v398 = vunpack.c.l.b16 %v345
        %v399 = vunpack.c.l.b16 %v346
        %v400 = vunpack.c.l.b16 %v347
        %v401 = vunpack.c.l.b16 %v348
        %v402 = vunpack.c.l.b16 %v349
        %v403 = vpack.c.b16 %v388, %v387
        %v404 = vpack.c.b16 %v390, %v389
        %v405 = vpack.c.b16 %v392, %v391
        %v406 = vpack.c.b16 %v394, %v393
        %v407 = vpack.c.b16 %v396, %v395
        %v408 = vpack.c.b16 %v398, %v397
        %v409 = vpack.c.b16 %v400, %v399
        %v410 = vpack.c.b16 %v402, %v401
        %v435 = vunpack.c.l.b16 %v351
        %v436 = vunpack.c.l.b16 %v352
        %v437 = vunpack.c.l.b16 %v353
        %v438 = vunpack.c.l.b16 %v354
        %v439 = vunpack.c.l.b16 %v355
        %v440 = vunpack.c.l.b16 %v356
        %v441 = vunpack.c.l.b16 %v357
        %v442 = vunpack.c.l.b16 %v358
        %v443 = vunpack.c.l.b16 %v359
        %v444 = vunpack.c.l.b16 %v360
        %v445 = vunpack.c.l.b16 %v361
        %v446 = vunpack.c.l.b16 %v362
        %v447 = vunpack.c.l.b16 %v363
        %v448 = vunpack.c.l.b16 %v364
        %v449 = vunpack.c.l.b16 %v365
        %v450 = vunpack.c.l.b16 %v366
        %v451 = vpack.c.b16 %v436, %v435
        %v452 = vpack.c.b16 %v438, %v437
        %v453 = vpack.c.b16 %v440, %v439
        %v454 = vpack.c.b16 %v442, %v441
        %v455 = vpack.c.b16 %v444, %v443
        %v456 = vpack.c.b16 %v446, %v445
        %v457 = vpack.c.b16 %v448, %v447
        %v458 = vpack.c.b16 %v450, %v449
        %467 = vmatprep.subr.bf16.mxu0 0
        %468 = vmatpush1.bf16.msra.mxu0 %v451
        %469 = vmatprep.subr.bf16.mxu0 0
        %470 = vmatpush1.bf16.msra.mxu0 %v452
        %471 = vmatprep.subr.bf16.mxu0 0
        %472 = vmatpush1.bf16.msra.mxu0 %v453
        %473 = vmatprep.subr.bf16.mxu0 0
        %474 = vmatpush1.bf16.msra.mxu0 %v454
        %475 = vmatprep.subr.bf16.mxu0 0
        %476 = vmatpush1.bf16.msra.mxu0 %v455
        %477 = vmatprep.subr.bf16.mxu0 0
        %478 = vmatpush1.bf16.msra.mxu0 %v456
        %479 = vmatprep.subr.bf16.mxu0 0
        %480 = vmatpush1.bf16.msra.mxu0 %v457
        %481 = vmatprep.subr.bf16.mxu0 0
        %482 = vmatpush1.bf16.msra.mxu0 %v458
        %483 = vmatprep.subr.bf16.mxu0 0
        %484 = vmatpush1.bf16.msra.mxu0 0
        %485 = vmatprep.subr.bf16.mxu0 0
        %486 = vmatpush1.bf16.msra.mxu0 0
        %487 = vmatprep.subr.bf16.mxu0 0
        %488 = vmatpush1.bf16.msra.mxu0 0
        %489 = vmatprep.subr.bf16.mxu0 0
        %490 = vmatpush1.bf16.msra.mxu0 0
        %491 = vmatprep.subr.bf16.mxu0 0
        %492 = vmatpush1.bf16.msra.mxu0 0
        %493 = vmatprep.subr.bf16.mxu0 0
        %494 = vmatpush1.bf16.msra.mxu0 0
        %495 = vmatprep.subr.bf16.mxu0 0
        %496 = vmatpush1.bf16.msra.mxu0 0
        %497 = vmatprep.subr.bf16.mxu0 0
        %498 = vmatpush1.bf16.msra.mxu0 0
        %499 = vmatprep.mubr.bf16.mxu0 0
        %500 = vmatmul.mubr.bf16.gmra.mrb[0].mxu0 %v403
        %v501 = vpop.f32.mrb[0].mxu0
        %v502 = vadd.f32 %v370, %v501
        %v503 = vpop.f32.mrb[0].mxu0
        %v504 = vpop.f32.mrb[0].mxu0
        %v505 = vadd.f32 %v370, %v504
        %v506 = vpop.f32.mrb[0].mxu0
        %507 = vmatprep.mubr.bf16.mxu0 0
        %508 = vmatmul.mubr.bf16.gmra.mrb[0].mxu0 %v404
        %v509 = vpop.f32.mrb[0].mxu0
        %v510 = vadd.f32 %v370, %v509
        %v511 = vpop.f32.mrb[0].mxu0
        %v512 = vpop.f32.mrb[0].mxu0
        %v513 = vadd.f32 %v370, %v512
        %v514 = vpop.f32.mrb[0].mxu0
        %515 = vmatprep.mubr.bf16.mxu0 0
        %516 = vmatmul.mubr.bf16.gmra.mrb[0].mxu0 %v405
        %v517 = vpop.f32.mrb[0].mxu0
        %v518 = vadd.f32 %v370, %v517
        %v519 = vpop.f32.mrb[0].mxu0
        %v520 = vpop.f32.mrb[0].mxu0
        %v521 = vadd.f32 %v370, %v520
        %v522 = vpop.f32.mrb[0].mxu0
        %523 = vmatprep.mubr.bf16.mxu0 0
        %524 = vmatmul.mubr.bf16.gmra.mrb[0].mxu0 %v406
        %v525 = vpop.f32.mrb[0].mxu0
        %v526 = vadd.f32 %v370, %v525
        %v527 = vpop.f32.mrb[0].mxu0
        %v528 = vpop.f32.mrb[0].mxu0
        %v529 = vadd.f32 %v370, %v528
        %v530 = vpop.f32.mrb[0].mxu0
        %531 = vmatprep.mubr.bf16.mxu0 0
        %532 = vmatmul.mubr.bf16.gmra.mrb[0].mxu0 %v407
        %v533 = vpop.f32.mrb[0].mxu0
        %v534 = vadd.f32 %v370, %v533
        %v535 = vpop.f32.mrb[0].mxu0
        %v536 = vpop.f32.mrb[0].mxu0
        %v537 = vadd.f32 %v370, %v536
        %v538 = vpop.f32.mrb[0].mxu0
        %539 = vmatprep.mubr.bf16.mxu0 0
        %540 = vmatmul.mubr.bf16.gmra.mrb[0].mxu0 %v408
        %v541 = vpop.f32.mrb[0].mxu0
        %v542 = vadd.f32 %v370, %v541
        %v543 = vpop.f32.mrb[0].mxu0
        %v544 = vpop.f32.mrb[0].mxu0
        %v545 = vadd.f32 %v370, %v544
        %v546 = vpop.f32.mrb[0].mxu0
        %547 = vmatprep.mubr.bf16.mxu0 0
        %548 = vmatmul.mubr.bf16.gmra.mrb[0].mxu0 %v409
        %v549 = vpop.f32.mrb[0].mxu0
        %v550 = vadd.f32 %v370, %v549
        %v551 = vpop.f32.mrb[0].mxu0
        %v552 = vpop.f32.mrb[0].mxu0
        %v553 = vadd.f32 %v370, %v552
        %v554 = vpop.f32.mrb[0].mxu0
        %555 = vmatprep.mubr.bf16.mxu0 0
        %556 = vmatmul.mubr.bf16.gmra.mrb[0].mxu0 %v410
        %v557 = vpop.f32.mrb[0].mxu0
        %v558 = vadd.f32 %v370, %v557
        %v559 = vpop.f32.mrb[0].mxu0
        %v560 = vpop.f32.mrb[0].mxu0
        %v561 = vadd.f32 %v370, %v560
        %v562 = vpop.f32.mrb[0].mxu0
        %563 = vdwg.mxu0
        %v564 = vmax.f32 %v502, 0.0
        %v565 = vmax.f32 %v505, 0.0
        %v566 = vmax.f32 %v510, 0.0
        %v567 = vmax.f32 %v513, 0.0
        %v568 = vmax.f32 %v518, 0.0
        %v569 = vmax.f32 %v521, 0.0
        %v570 = vmax.f32 %v526, 0.0
        %v571 = vmax.f32 %v529, 0.0
        %v572 = vmax.f32 %v534, 0.0
        %v573 = vmax.f32 %v537, 0.0
        %v574 = vmax.f32 %v542, 0.0
        %v575 = vmax.f32 %v545, 0.0
        %v576 = vmax.f32 %v550, 0.0
        %v577 = vmax.f32 %v553, 0.0
        %v578 = vmax.f32 %v558, 0.0
        %v579 = vmax.f32 %v561, 0.0
        %v580 = vpack.c.bf16 %v565, %v564
        %v581 = vpack.c.bf16 %v567, %v566
        %v582 = vpack.c.bf16 %v569, %v568
        %v583 = vpack.c.bf16 %v571, %v570
        %v584 = vpack.c.bf16 %v573, %v572
        %v585 = vpack.c.bf16 %v575, %v574
        %v586 = vpack.c.bf16 %v577, %v576
        %v587 = vpack.c.bf16 %v579, %v578
        %v588 = vld [vmem:[#allocation8] sm:$0xf]
        %v589 = vld [vmem:[#allocation8 + $0x4] sm:$0xf]
        %v590 = vld [vmem:[#allocation8 + $0x8] sm:$0xf]
        %v591 = vld [vmem:[#allocation8 + $0xc] sm:$0xf]
        %v592 = vld [vmem:[#allocation8 + $0x10] sm:$0xf]
        %v593 = vld [vmem:[#allocation8 + $0x14] sm:$0xf]
        %v594 = vld [vmem:[#allocation8 + $0x18] sm:$0xf]
        %v595 = vld [vmem:[#allocation8 + $0x1c] sm:$0xf]
        %v596 = vld [vmem:[#allocation8 + $0x20] sm:$0xf]
        %v597 = vld [vmem:[#allocation8 + $0x24] sm:$0xf]
        %v598 = vld [vmem:[#allocation8 + $0x28] sm:$0xf]
        %v599 = vld [vmem:[#allocation8 + $0x2c] sm:$0xf]
        %v600 = vld [vmem:[#allocation8 + $0x30] sm:$0xf]
        %v601 = vld [vmem:[#allocation8 + $0x34] sm:$0xf]
        %v602 = vld [vmem:[#allocation8 + $0x38] sm:$0xf]
        %v603 = vld [vmem:[#allocation8 + $0x3c] sm:$0xf]
        %v620 = vunpack.c.l.b16 %v588
        %v621 = vunpack.c.l.b16 %v589
        %v622 = vunpack.c.l.b16 %v590
        %v623 = vunpack.c.l.b16 %v591
        %v624 = vunpack.c.l.b16 %v592
        %v625 = vunpack.c.l.b16 %v593
        %v626 = vunpack.c.l.b16 %v594
        %v627 = vunpack.c.l.b16 %v595
        %v628 = vunpack.c.l.b16 %v596
        %v629 = vunpack.c.l.b16 %v597
        %v630 = vunpack.c.l.b16 %v598
        %v631 = vunpack.c.l.b16 %v599
        %v632 = vunpack.c.l.b16 %v600
        %v633 = vunpack.c.l.b16 %v601
        %v634 = vunpack.c.l.b16 %v602
        %v635 = vunpack.c.l.b16 %v603
        %v636 = vpack.c.b16 %v621, %v620
        %v637 = vpack.c.b16 %v623, %v622
        %v638 = vpack.c.b16 %v625, %v624
        %v639 = vpack.c.b16 %v627, %v626
        %v640 = vpack.c.b16 %v629, %v628
        %v641 = vpack.c.b16 %v631, %v630
        %v642 = vpack.c.b16 %v633, %v632
        %v643 = vpack.c.b16 %v635, %v634
        %652 = vmatprep.subr.bf16.mxu0 0
        %653 = vmatpush1.bf16.msra.mxu0 %v636
        %654 = vmatprep.subr.bf16.mxu0 0
        %655 = vmatpush1.bf16.msra.mxu0 %v637
        %656 = vmatprep.subr.bf16.mxu0 0
        %657 = vmatpush1.bf16.msra.mxu0 %v638
        %658 = vmatprep.subr.bf16.mxu0 0
        %659 = vmatpush1.bf16.msra.mxu0 %v639
        %660 = vmatprep.subr.bf16.mxu0 0
        %661 = vmatpush1.bf16.msra.mxu0 %v640
        %662 = vmatprep.subr.bf16.mxu0 0
        %663 = vmatpush1.bf16.msra.mxu0 %v641
        %664 = vmatprep.subr.bf16.mxu0 0
        %665 = vmatpush1.bf16.msra.mxu0 %v642
        %666 = vmatprep.subr.bf16.mxu0 0
        %667 = vmatpush1.bf16.msra.mxu0 %v643
        %668 = vmatprep.subr.bf16.mxu0 0
        %669 = vmatpush1.bf16.msra.mxu0 0
        %670 = vmatprep.subr.bf16.mxu0 0
        %671 = vmatpush1.bf16.msra.mxu0 0
        %672 = vmatprep.subr.bf16.mxu0 0
        %673 = vmatpush1.bf16.msra.mxu0 0
        %674 = vmatprep.subr.bf16.mxu0 0
        %675 = vmatpush1.bf16.msra.mxu0 0
        %676 = vmatprep.subr.bf16.mxu0 0
        %677 = vmatpush1.bf16.msra.mxu0 0
        %678 = vmatprep.subr.bf16.mxu0 0
        %679 = vmatpush1.bf16.msra.mxu0 0
        %680 = vmatprep.subr.bf16.mxu0 0
        %681 = vmatpush1.bf16.msra.mxu0 0
        %682 = vmatprep.subr.bf16.mxu0 0
        %683 = vmatpush1.bf16.msra.mxu0 0
        %684 = vmatprep.mubr.bf16.mxu0 0
        %685 = vmatmul.mubr.bf16.gmra.mrb[0].mxu0 %v580
        %v686 = vpop.f32.mrb[0].mxu0
        %v687 = vadd.f32 0.0, %v686
        %v688 = vpop.f32.mrb[0].mxu0
        %v689 = vpop.f32.mrb[0].mxu0
        %v690 = vadd.f32 0.0, %v689
        %v691 = vpop.f32.mrb[0].mxu0
        %692 = vmatprep.mubr.bf16.mxu0 0
        %693 = vmatmul.mubr.bf16.gmra.mrb[0].mxu0 %v581
        %v694 = vpop.f32.mrb[0].mxu0
        %v695 = vadd.f32 0.0, %v694
        %v696 = vpop.f32.mrb[0].mxu0
        %v697 = vpop.f32.mrb[0].mxu0
        %v698 = vadd.f32 0.0, %v697
        %v699 = vpop.f32.mrb[0].mxu0
        %700 = vmatprep.mubr.bf16.mxu0 0
        %701 = vmatmul.mubr.bf16.gmra.mrb[0].mxu0 %v582
        %v702 = vpop.f32.mrb[0].mxu0
        %v703 = vadd.f32 0.0, %v702
        %v704 = vpop.f32.mrb[0].mxu0
        %v705 = vpop.f32.mrb[0].mxu0
        %v706 = vadd.f32 0.0, %v705
        %v707 = vpop.f32.mrb[0].mxu0
        %708 = vmatprep.mubr.bf16.mxu0 0
        %709 = vmatmul.mubr.bf16.gmra.mrb[0].mxu0 %v583
        %v710 = vpop.f32.mrb[0].mxu0
        %v711 = vadd.f32 0.0, %v710
        %v712 = vpop.f32.mrb[0].mxu0
        %v713 = vpop.f32.mrb[0].mxu0
        %v714 = vadd.f32 0.0, %v713
        %v715 = vpop.f32.mrb[0].mxu0
        %716 = vmatprep.mubr.bf16.mxu0 0
        %717 = vmatmul.mubr.bf16.gmra.mrb[0].mxu0 %v584
        %v718 = vpop.f32.mrb[0].mxu0
        %v719 = vadd.f32 0.0, %v718
        %v720 = vpop.f32.mrb[0].mxu0
        %v721 = vpop.f32.mrb[0].mxu0
        %v722 = vadd.f32 0.0, %v721
        %v723 = vpop.f32.mrb[0].mxu0
        %724 = vmatprep.mubr.bf16.mxu0 0
        %725 = vmatmul.mubr.bf16.gmra.mrb[0].mxu0 %v585
        %v726 = vpop.f32.mrb[0].mxu0
        %v727 = vadd.f32 0.0, %v726
        %v728 = vpop.f32.mrb[0].mxu0
        %v729 = vpop.f32.mrb[0].mxu0
        %v730 = vadd.f32 0.0, %v729
        %v731 = vpop.f32.mrb[0].mxu0
        %732 = vmatprep.mubr.bf16.mxu0 0
        %733 = vmatmul.mubr.bf16.gmra.mrb[0].mxu0 %v586
        %v734 = vpop.f32.mrb[0].mxu0
        %v735 = vadd.f32 0.0, %v734
        %v736 = vpop.f32.mrb[0].mxu0
        %v737 = vpop.f32.mrb[0].mxu0
        %v738 = vadd.f32 0.0, %v737
        %v739 = vpop.f32.mrb[0].mxu0
        %740 = vmatprep.mubr.bf16.mxu0 0
        %741 = vmatmul.mubr.bf16.gmra.mrb[0].mxu0 %v587
        %v742 = vpop.f32.mrb[0].mxu0
        %v743 = vadd.f32 0.0, %v742
        %v744 = vpop.f32.mrb[0].mxu0
        %v745 = vpop.f32.mrb[0].mxu0
        %v746 = vadd.f32 0.0, %v745
        %v747 = vpop.f32.mrb[0].mxu0
        %748 = vdwg.mxu0
        %v749 = vpack.c.bf16 %v690, %v687
        %v750 = vpack.c.bf16 %v698, %v695
        %v751 = vpack.c.bf16 %v706, %v703
        %v752 = vpack.c.bf16 %v714, %v711
        %v753 = vpack.c.bf16 %v722, %v719
        %v754 = vpack.c.bf16 %v730, %v727
        %v755 = vpack.c.bf16 %v738, %v735
        %v756 = vpack.c.bf16 %v746, %v743
        %v757 = vlaneseq
        %v758 = vshrl.u32 %v757, 7
        %v759 = vsub.s32 1, %v758
        %v760 = vrot.slane %v350, %v759
        %761 = vmatprep.subr.bf16.mxu0 0
        %762 = vmatpush1.bf16.msra.mxu0 %v749
        %763 = vmatprep.subr.bf16.mxu0 0
        %764 = vmatpush1.bf16.msra.mxu0 %v750
        %765 = vmatprep.subr.bf16.mxu0 0
        %766 = vmatpush1.bf16.msra.mxu0 %v751
        %767 = vmatprep.subr.bf16.mxu0 0
        %768 = vmatpush1.bf16.msra.mxu0 %v752
        %769 = vmatprep.subr.bf16.mxu0 0
        %770 = vmatpush1.bf16.msra.mxu0 %v753
        %771 = vmatprep.subr.bf16.mxu0 0
        %772 = vmatpush1.bf16.msra.mxu0 %v754
        %773 = vmatprep.subr.bf16.mxu0 0
        %774 = vmatpush1.bf16.msra.mxu0 %v755
        %775 = vmatprep.subr.bf16.mxu0 0
        %776 = vmatpush1.bf16.msra.mxu0 %v756
        %777 = vmatprep.subr.bf16.mxu0 0
        %778 = vmatpush1.bf16.msra.mxu0 0
        %779 = vmatprep.subr.bf16.mxu0 0
        %780 = vmatpush1.bf16.msra.mxu0 0
        %781 = vmatprep.subr.bf16.mxu0 0
        %782 = vmatpush1.bf16.msra.mxu0 0
        %783 = vmatprep.subr.bf16.mxu0 0
        %784 = vmatpush1.bf16.msra.mxu0 0
        %785 = vmatprep.subr.bf16.mxu0 0
        %786 = vmatpush1.bf16.msra.mxu0 0
        %787 = vmatprep.subr.bf16.mxu0 0
        %788 = vmatpush1.bf16.msra.mxu0 0
        %789 = vmatprep.subr.bf16.mxu0 0
        %790 = vmatpush1.bf16.msra.mxu0 0
        %791 = vmatprep.subr.bf16.mxu0 0
        %792 = vmatpush1.bf16.msra.mxu0 0
        %793 = vmatprep.mubr.bf16.mxu0 0
        %794 = vmatmul.mubr.bf16.gmra.mrb[0].mxu0 %v403
        %v795 = vpop.f32.mrb[0].mxu0
        %v796 = vadd.f32 %v760, %v795
        %v797 = vpop.f32.mrb[0].mxu0
        %v798 = vpop.f32.mrb[0].mxu0
        %v799 = vadd.f32 %v760, %v798
        %v800 = vpop.f32.mrb[0].mxu0
        %801 = vmatprep.mubr.bf16.mxu0 0
        %802 = vmatmul.mubr.bf16.gmra.mrb[0].mxu0 %v404
        %v803 = vpop.f32.mrb[0].mxu0
        %v804 = vadd.f32 %v760, %v803
        %v805 = vpop.f32.mrb[0].mxu0
        %v806 = vpop.f32.mrb[0].mxu0
        %v807 = vadd.f32 %v760, %v806
        %v808 = vpop.f32.mrb[0].mxu0
        %809 = vmatprep.mubr.bf16.mxu0 0
        %810 = vmatmul.mubr.bf16.gmra.mrb[0].mxu0 %v405
        %v811 = vpop.f32.mrb[0].mxu0
        %v812 = vadd.f32 %v760, %v811
        %v813 = vpop.f32.mrb[0].mxu0
        %v814 = vpop.f32.mrb[0].mxu0
        %v815 = vadd.f32 %v760, %v814
        %v816 = vpop.f32.mrb[0].mxu0
        %817 = vmatprep.mubr.bf16.mxu0 0
        %818 = vmatmul.mubr.bf16.gmra.mrb[0].mxu0 %v406
        %v819 = vpop.f32.mrb[0].mxu0
        %v820 = vadd.f32 %v760, %v819
        %v821 = vpop.f32.mrb[0].mxu0
        %v822 = vpop.f32.mrb[0].mxu0
        %v823 = vadd.f32 %v760, %v822
        %v824 = vpop.f32.mrb[0].mxu0
        %825 = vmatprep.mubr.bf16.mxu0 0
        %826 = vmatmul.mubr.bf16.gmra.mrb[0].mxu0 %v407
        %v827 = vpop.f32.mrb[0].mxu0
        %v828 = vadd.f32 %v760, %v827
        %v829 = vpop.f32.mrb[0].mxu0
        %v830 = vpop.f32.mrb[0].mxu0
        %v831 = vadd.f32 %v760, %v830
        %v832 = vpop.f32.mrb[0].mxu0
        %833 = vmatprep.mubr.bf16.mxu0 0
        %834 = vmatmul.mubr.bf16.gmra.mrb[0].mxu0 %v408
        %v835 = vpop.f32.mrb[0].mxu0
        %v836 = vadd.f32 %v760, %v835
        %v837 = vpop.f32.mrb[0].mxu0
        %v838 = vpop.f32.mrb[0].mxu0
        %v839 = vadd.f32 %v760, %v838
        %v840 = vpop.f32.mrb[0].mxu0
        %841 = vmatprep.mubr.bf16.mxu0 0
        %842 = vmatmul.mubr.bf16.gmra.mrb[0].mxu0 %v409
        %v843 = vpop.f32.mrb[0].mxu0
        %v844 = vadd.f32 %v760, %v843
        %v845 = vpop.f32.mrb[0].mxu0
        %v846 = vpop.f32.mrb[0].mxu0
        %v847 = vadd.f32 %v760, %v846
        %v848 = vpop.f32.mrb[0].mxu0
        %849 = vmatprep.mubr.bf16.mxu0 0
        %850 = vmatmul.mubr.bf16.gmra.mrb[0].mxu0 %v410
        %v851 = vpop.f32.mrb[0].mxu0
        %v852 = vadd.f32 %v760, %v851
        %v853 = vpop.f32.mrb[0].mxu0
        %v854 = vpop.f32.mrb[0].mxu0
        %v855 = vadd.f32 %v760, %v854
        %v856 = vpop.f32.mrb[0].mxu0
        %857 = vdwg.mxu0
        %v858 = vmax.f32 %v796, 0.0
        %v859 = vmax.f32 %v799, 0.0
        %v860 = vmax.f32 %v804, 0.0
        %v861 = vmax.f32 %v807, 0.0
        %v862 = vmax.f32 %v812, 0.0
        %v863 = vmax.f32 %v815, 0.0
        %v864 = vmax.f32 %v820, 0.0
        %v865 = vmax.f32 %v823, 0.0
        %v866 = vmax.f32 %v828, 0.0
        %v867 = vmax.f32 %v831, 0.0
        %v868 = vmax.f32 %v836, 0.0
        %v869 = vmax.f32 %v839, 0.0
        %v870 = vmax.f32 %v844, 0.0
        %v871 = vmax.f32 %v847, 0.0
        %v872 = vmax.f32 %v852, 0.0
        %v873 = vmax.f32 %v855, 0.0
        %v874 = vpack.c.bf16 %v859, %v858
        %v875 = vpack.c.bf16 %v861, %v860
        %v876 = vpack.c.bf16 %v863, %v862
        %v877 = vpack.c.bf16 %v865, %v864
        %v878 = vpack.c.bf16 %v867, %v866
        %v879 = vpack.c.bf16 %v869, %v868
        %v880 = vpack.c.bf16 %v871, %v870
        %v881 = vpack.c.bf16 %v873, %v872
        %s882 = scalar_lea.vmem [#allocation8], 64
        %v883 = vld [vmem:[%s882] sm:$0xf]
        %v884 = vld [vmem:[%s882 + $0x4] sm:$0xf]
        %v885 = vld [vmem:[%s882 + $0x8] sm:$0xf]
        %v886 = vld [vmem:[%s882 + $0xc] sm:$0xf]
        %v887 = vld [vmem:[%s882 + $0x10] sm:$0xf]
        %v888 = vld [vmem:[%s882 + $0x14] sm:$0xf]
        %v889 = vld [vmem:[%s882 + $0x18] sm:$0xf]
        %v890 = vld [vmem:[%s882 + $0x1c] sm:$0xf]
        %v891 = vld [vmem:[%s882 + $0x20] sm:$0xf]
        %v892 = vld [vmem:[%s882 + $0x24] sm:$0xf]
        %v893 = vld [vmem:[%s882 + $0x28] sm:$0xf]
        %v894 = vld [vmem:[%s882 + $0x2c] sm:$0xf]
        %v895 = vld [vmem:[%s882 + $0x30] sm:$0xf]
        %v896 = vld [vmem:[%s882 + $0x34] sm:$0xf]
        %v897 = vld [vmem:[%s882 + $0x38] sm:$0xf]
        %v898 = vld [vmem:[%s882 + $0x3c] sm:$0xf]
        %v915 = vunpack.c.l.b16 %v883
        %v916 = vunpack.c.l.b16 %v884
        %v917 = vunpack.c.l.b16 %v885
        %v918 = vunpack.c.l.b16 %v886
        %v919 = vunpack.c.l.b16 %v887
        %v920 = vunpack.c.l.b16 %v888
        %v921 = vunpack.c.l.b16 %v889
        %v922 = vunpack.c.l.b16 %v890
        %v923 = vunpack.c.l.b16 %v891
        %v924 = vunpack.c.l.b16 %v892
        %v925 = vunpack.c.l.b16 %v893
        %v926 = vunpack.c.l.b16 %v894
        %v927 = vunpack.c.l.b16 %v895
        %v928 = vunpack.c.l.b16 %v896
        %v929 = vunpack.c.l.b16 %v897
        %v930 = vunpack.c.l.b16 %v898
        %v931 = vpack.c.b16 %v916, %v915
        %v932 = vpack.c.b16 %v918, %v917
        %v933 = vpack.c.b16 %v920, %v919
        %v934 = vpack.c.b16 %v922, %v921
        %v935 = vpack.c.b16 %v924, %v923
        %v936 = vpack.c.b16 %v926, %v925
        %v937 = vpack.c.b16 %v928, %v927
        %v938 = vpack.c.b16 %v930, %v929
        %947 = vmatprep.subr.bf16.mxu0 0
        %948 = vmatpush1.bf16.msra.mxu0 %v931
        %949 = vmatprep.subr.bf16.mxu0 0
        %950 = vmatpush1.bf16.msra.mxu0 %v932
        %951 = vmatprep.subr.bf16.mxu0 0
        %952 = vmatpush1.bf16.msra.mxu0 %v933
        %953 = vmatprep.subr.bf16.mxu0 0
        %954 = vmatpush1.bf16.msra.mxu0 %v934
        %955 = vmatprep.subr.bf16.mxu0 0
        %956 = vmatpush1.bf16.msra.mxu0 %v935
        %957 = vmatprep.subr.bf16.mxu0 0
        %958 = vmatpush1.bf16.msra.mxu0 %v936
        %959 = vmatprep.subr.bf16.mxu0 0
        %960 = vmatpush1.bf16.msra.mxu0 %v937
        %961 = vmatprep.subr.bf16.mxu0 0
        %962 = vmatpush1.bf16.msra.mxu0 %v938
        %963 = vmatprep.subr.bf16.mxu0 0
        %964 = vmatpush1.bf16.msra.mxu0 0
        %965 = vmatprep.subr.bf16.mxu0 0
        %966 = vmatpush1.bf16.msra.mxu0 0
        %967 = vmatprep.subr.bf16.mxu0 0
        %968 = vmatpush1.bf16.msra.mxu0 0
        %969 = vmatprep.subr.bf16.mxu0 0
        %970 = vmatpush1.bf16.msra.mxu0 0
        %971 = vmatprep.subr.bf16.mxu0 0
        %972 = vmatpush1.bf16.msra.mxu0 0
        %973 = vmatprep.subr.bf16.mxu0 0
        %974 = vmatpush1.bf16.msra.mxu0 0
        %975 = vmatprep.subr.bf16.mxu0 0
        %976 = vmatpush1.bf16.msra.mxu0 0
        %977 = vmatprep.subr.bf16.mxu0 0
        %978 = vmatpush1.bf16.msra.mxu0 0
        %979 = vmatprep.mubr.bf16.mxu0 0
        %980 = vmatmul.mubr.bf16.gmra.mrb[0].mxu0 %v874
        %v981 = vpop.f32.mrb[0].mxu0
        %v982 = vadd.f32 0.0, %v981
        %v983 = vpop.f32.mrb[0].mxu0
        %v984 = vpop.f32.mrb[0].mxu0
        %v985 = vadd.f32 0.0, %v984
        %v986 = vpop.f32.mrb[0].mxu0
        %987 = vmatprep.mubr.bf16.mxu0 0
        %988 = vmatmul.mubr.bf16.gmra.mrb[0].mxu0 %v875
        %v989 = vpop.f32.mrb[0].mxu0
        %v990 = vadd.f32 0.0, %v989
        %v991 = vpop.f32.mrb[0].mxu0
        %v992 = vpop.f32.mrb[0].mxu0
        %v993 = vadd.f32 0.0, %v992
        %v994 = vpop.f32.mrb[0].mxu0
        %995 = vmatprep.mubr.bf16.mxu0 0
        %996 = vmatmul.mubr.bf16.gmra.mrb[0].mxu0 %v876
        %v997 = vpop.f32.mrb[0].mxu0
        %v998 = vadd.f32 0.0, %v997
        %v999 = vpop.f32.mrb[0].mxu0
        %v1000 = vpop.f32.mrb[0].mxu0
        %v1001 = vadd.f32 0.0, %v1000
        %v1002 = vpop.f32.mrb[0].mxu0
        %1003 = vmatprep.mubr.bf16.mxu0 0
        %1004 = vmatmul.mubr.bf16.gmra.mrb[0].mxu0 %v877
        %v1005 = vpop.f32.mrb[0].mxu0
        %v1006 = vadd.f32 0.0, %v1005
        %v1007 = vpop.f32.mrb[0].mxu0
        %v1008 = vpop.f32.mrb[0].mxu0
        %v1009 = vadd.f32 0.0, %v1008
        %v1010 = vpop.f32.mrb[0].mxu0
        %1011 = vmatprep.mubr.bf16.mxu0 0
        %1012 = vmatmul.mubr.bf16.gmra.mrb[0].mxu0 %v878
        %v1013 = vpop.f32.mrb[0].mxu0
        %v1014 = vadd.f32 0.0, %v1013
        %v1015 = vpop.f32.mrb[0].mxu0
        %v1016 = vpop.f32.mrb[0].mxu0
        %v1017 = vadd.f32 0.0, %v1016
        %v1018 = vpop.f32.mrb[0].mxu0
        %1019 = vmatprep.mubr.bf16.mxu0 0
        %1020 = vmatmul.mubr.bf16.gmra.mrb[0].mxu0 %v879
        %v1021 = vpop.f32.mrb[0].mxu0
        %v1022 = vadd.f32 0.0, %v1021
        %v1023 = vpop.f32.mrb[0].mxu0
        %v1024 = vpop.f32.mrb[0].mxu0
        %v1025 = vadd.f32 0.0, %v1024
        %v1026 = vpop.f32.mrb[0].mxu0
        %1027 = vmatprep.mubr.bf16.mxu0 0
        %1028 = vmatmul.mubr.bf16.gmra.mrb[0].mxu0 %v880
        %v1029 = vpop.f32.mrb[0].mxu0
        %v1030 = vadd.f32 0.0, %v1029
        %v1031 = vpop.f32.mrb[0].mxu0
        %v1032 = vpop.f32.mrb[0].mxu0
        %v1033 = vadd.f32 0.0, %v1032
        %v1034 = vpop.f32.mrb[0].mxu0
        %1035 = vmatprep.mubr.bf16.mxu0 0
        %1036 = vmatmul.mubr.bf16.gmra.mrb[0].mxu0 %v881
        %v1037 = vpop.f32.mrb[0].mxu0
        %v1038 = vadd.f32 0.0, %v1037
        %v1039 = vpop.f32.mrb[0].mxu0
        %v1040 = vpop.f32.mrb[0].mxu0
        %v1041 = vadd.f32 0.0, %v1040
        %v1042 = vpop.f32.mrb[0].mxu0
        %1043 = vdwg.mxu0
        %v1044 = vpack.c.bf16 %v985, %v982
        %v1045 = vpack.c.bf16 %v993, %v990
        %v1046 = vpack.c.bf16 %v1001, %v998
        %v1047 = vpack.c.bf16 %v1009, %v1006
        %v1048 = vpack.c.bf16 %v1017, %v1014
        %v1049 = vpack.c.bf16 %v1025, %v1022
        %v1050 = vpack.c.bf16 %v1033, %v1030
        %v1051 = vpack.c.bf16 %v1041, %v1038
        %v1052 = vlaneseq
        %v1053 = vshrl.u32 %v1052, 7
        %v1054 = vsub.s32 2, %v1053
        %v1055 = vrot.slane %v350, %v1054
        %1056 = vmatprep.subr.bf16.mxu0 0
        %1057 = vmatpush1.bf16.msra.mxu0 %v1044
        %1058 = vmatprep.subr.bf16.mxu0 0
        %1059 = vmatpush1.bf16.msra.mxu0 %v1045
        %1060 = vmatprep.subr.bf16.mxu0 0
        %1061 = vmatpush1.bf16.msra.mxu0 %v1046
        %1062 = vmatprep.subr.bf16.mxu0 0
        %1063 = vmatpush1.bf16.msra.mxu0 %v1047
        %1064 = vmatprep.subr.bf16.mxu0 0
        %1065 = vmatpush1.bf16.msra.mxu0 %v1048
        %1066 = vmatprep.subr.bf16.mxu0 0
        %1067 = vmatpush1.bf16.msra.mxu0 %v1049
        %1068 = vmatprep.subr.bf16.mxu0 0
        %1069 = vmatpush1.bf16.msra.mxu0 %v1050
        %1070 = vmatprep.subr.bf16.mxu0 0
        %1071 = vmatpush1.bf16.msra.mxu0 %v1051
        %1072 = vmatprep.subr.bf16.mxu0 0
        %1073 = vmatpush1.bf16.msra.mxu0 0
        %1074 = vmatprep.subr.bf16.mxu0 0
        %1075 = vmatpush1.bf16.msra.mxu0 0
        %1076 = vmatprep.subr.bf16.mxu0 0
        %1077 = vmatpush1.bf16.msra.mxu0 0
        %1078 = vmatprep.subr.bf16.mxu0 0
        %1079 = vmatpush1.bf16.msra.mxu0 0
        %1080 = vmatprep.subr.bf16.mxu0 0
        %1081 = vmatpush1.bf16.msra.mxu0 0
        %1082 = vmatprep.subr.bf16.mxu0 0
        %1083 = vmatpush1.bf16.msra.mxu0 0
        %1084 = vmatprep.subr.bf16.mxu0 0
        %1085 = vmatpush1.bf16.msra.mxu0 0
        %1086 = vmatprep.subr.bf16.mxu0 0
        %1087 = vmatpush1.bf16.msra.mxu0 0
        %1088 = vmatprep.mubr.bf16.mxu0 0
        %1089 = vmatmul.mubr.bf16.gmra.mrb[0].mxu0 %v403
        %v1090 = vpop.f32.mrb[0].mxu0
        %v1091 = vadd.f32 %v1055, %v1090
        %v1092 = vpop.f32.mrb[0].mxu0
        %v1093 = vpop.f32.mrb[0].mxu0
        %v1094 = vadd.f32 %v1055, %v1093
        %v1095 = vpop.f32.mrb[0].mxu0
        %1096 = vmatprep.mubr.bf16.mxu0 0
        %1097 = vmatmul.mubr.bf16.gmra.mrb[0].mxu0 %v404
        %v1098 = vpop.f32.mrb[0].mxu0
        %v1099 = vadd.f32 %v1055, %v1098
        %v1100 = vpop.f32.mrb[0].mxu0
        %v1101 = vpop.f32.mrb[0].mxu0
        %v1102 = vadd.f32 %v1055, %v1101
        %v1103 = vpop.f32.mrb[0].mxu0
        %1104 = vmatprep.mubr.bf16.mxu0 0
        %1105 = vmatmul.mubr.bf16.gmra.mrb[0].mxu0 %v405
        %v1106 = vpop.f32.mrb[0].mxu0
        %v1107 = vadd.f32 %v1055, %v1106
        %v1108 = vpop.f32.mrb[0].mxu0
        %v1109 = vpop.f32.mrb[0].mxu0
        %v1110 = vadd.f32 %v1055, %v1109
        %v1111 = vpop.f32.mrb[0].mxu0
        %1112 = vmatprep.mubr.bf16.mxu0 0
        %1113 = vmatmul.mubr.bf16.gmra.mrb[0].mxu0 %v406
        %v1114 = vpop.f32.mrb[0].mxu0
        %v1115 = vadd.f32 %v1055, %v1114
        %v1116 = vpop.f32.mrb[0].mxu0
        %v1117 = vpop.f32.mrb[0].mxu0
        %v1118 = vadd.f32 %v1055, %v1117
        %v1119 = vpop.f32.mrb[0].mxu0
        %1120 = vmatprep.mubr.bf16.mxu0 0
        %1121 = vmatmul.mubr.bf16.gmra.mrb[0].mxu0 %v407
        %v1122 = vpop.f32.mrb[0].mxu0
        %v1123 = vadd.f32 %v1055, %v1122
        %v1124 = vpop.f32.mrb[0].mxu0
        %v1125 = vpop.f32.mrb[0].mxu0
        %v1126 = vadd.f32 %v1055, %v1125
        %v1127 = vpop.f32.mrb[0].mxu0
        %1128 = vmatprep.mubr.bf16.mxu0 0
        %1129 = vmatmul.mubr.bf16.gmra.mrb[0].mxu0 %v408
        %v1130 = vpop.f32.mrb[0].mxu0
        %v1131 = vadd.f32 %v1055, %v1130
        %v1132 = vpop.f32.mrb[0].mxu0
        %v1133 = vpop.f32.mrb[0].mxu0
        %v1134 = vadd.f32 %v1055, %v1133
        %v1135 = vpop.f32.mrb[0].mxu0
        %1136 = vmatprep.mubr.bf16.mxu0 0
        %1137 = vmatmul.mubr.bf16.gmra.mrb[0].mxu0 %v409
        %v1138 = vpop.f32.mrb[0].mxu0
        %v1139 = vadd.f32 %v1055, %v1138
        %v1140 = vpop.f32.mrb[0].mxu0
        %v1141 = vpop.f32.mrb[0].mxu0
        %v1142 = vadd.f32 %v1055, %v1141
        %v1143 = vpop.f32.mrb[0].mxu0
        %1144 = vmatprep.mubr.bf16.mxu0 0
        %1145 = vmatmul.mubr.bf16.gmra.mrb[0].mxu0 %v410
        %v1146 = vpop.f32.mrb[0].mxu0
        %v1147 = vadd.f32 %v1055, %v1146
        %v1148 = vpop.f32.mrb[0].mxu0
        %v1149 = vpop.f32.mrb[0].mxu0
        %v1150 = vadd.f32 %v1055, %v1149
        %v1151 = vpop.f32.mrb[0].mxu0
        %1152 = vdwg.mxu0
        %v1153 = vmax.f32 %v1091, 0.0
        %v1154 = vmax.f32 %v1094, 0.0
        %v1155 = vmax.f32 %v1099, 0.0
        %v1156 = vmax.f32 %v1102, 0.0
        %v1157 = vmax.f32 %v1107, 0.0
        %v1158 = vmax.f32 %v1110, 0.0
        %v1159 = vmax.f32 %v1115, 0.0
        %v1160 = vmax.f32 %v1118, 0.0
        %v1161 = vmax.f32 %v1123, 0.0
        %v1162 = vmax.f32 %v1126, 0.0
        %v1163 = vmax.f32 %v1131, 0.0
        %v1164 = vmax.f32 %v1134, 0.0
        %v1165 = vmax.f32 %v1139, 0.0
        %v1166 = vmax.f32 %v1142, 0.0
        %v1167 = vmax.f32 %v1147, 0.0
        %v1168 = vmax.f32 %v1150, 0.0
        %v1169 = vpack.c.bf16 %v1154, %v1153
        %v1170 = vpack.c.bf16 %v1156, %v1155
        %v1171 = vpack.c.bf16 %v1158, %v1157
        %v1172 = vpack.c.bf16 %v1160, %v1159
        %v1173 = vpack.c.bf16 %v1162, %v1161
        %v1174 = vpack.c.bf16 %v1164, %v1163
        %v1175 = vpack.c.bf16 %v1166, %v1165
        %v1176 = vpack.c.bf16 %v1168, %v1167
        %s1177 = scalar_lea.vmem [#allocation8], 128
        %v1178 = vld [vmem:[%s1177] sm:$0xf]
        %v1179 = vld [vmem:[%s1177 + $0x4] sm:$0xf]
        %v1180 = vld [vmem:[%s1177 + $0x8] sm:$0xf]
        %v1181 = vld [vmem:[%s1177 + $0xc] sm:$0xf]
        %v1182 = vld [vmem:[%s1177 + $0x10] sm:$0xf]
        %v1183 = vld [vmem:[%s1177 + $0x14] sm:$0xf]
        %v1184 = vld [vmem:[%s1177 + $0x18] sm:$0xf]
        %v1185 = vld [vmem:[%s1177 + $0x1c] sm:$0xf]
        %v1186 = vld [vmem:[%s1177 + $0x20] sm:$0xf]
        %v1187 = vld [vmem:[%s1177 + $0x24] sm:$0xf]
        %v1188 = vld [vmem:[%s1177 + $0x28] sm:$0xf]
        %v1189 = vld [vmem:[%s1177 + $0x2c] sm:$0xf]
        %v1190 = vld [vmem:[%s1177 + $0x30] sm:$0xf]
        %v1191 = vld [vmem:[%s1177 + $0x34] sm:$0xf]
        %v1192 = vld [vmem:[%s1177 + $0x38] sm:$0xf]
        %v1193 = vld [vmem:[%s1177 + $0x3c] sm:$0xf]
        %v1210 = vunpack.c.l.b16 %v1178
        %v1211 = vunpack.c.l.b16 %v1179
        %v1212 = vunpack.c.l.b16 %v1180
        %v1213 = vunpack.c.l.b16 %v1181
        %v1214 = vunpack.c.l.b16 %v1182
        %v1215 = vunpack.c.l.b16 %v1183
        %v1216 = vunpack.c.l.b16 %v1184
        %v1217 = vunpack.c.l.b16 %v1185
        %v1218 = vunpack.c.l.b16 %v1186
        %v1219 = vunpack.c.l.b16 %v1187
        %v1220 = vunpack.c.l.b16 %v1188
        %v1221 = vunpack.c.l.b16 %v1189
        %v1222 = vunpack.c.l.b16 %v1190
        %v1223 = vunpack.c.l.b16 %v1191
        %v1224 = vunpack.c.l.b16 %v1192
        %v1225 = vunpack.c.l.b16 %v1193
        %v1226 = vpack.c.b16 %v1211, %v1210
        %v1227 = vpack.c.b16 %v1213, %v1212
        %v1228 = vpack.c.b16 %v1215, %v1214
        %v1229 = vpack.c.b16 %v1217, %v1216
        %v1230 = vpack.c.b16 %v1219, %v1218
        %v1231 = vpack.c.b16 %v1221, %v1220
        %v1232 = vpack.c.b16 %v1223, %v1222
        %v1233 = vpack.c.b16 %v1225, %v1224
        %1242 = vmatprep.subr.bf16.mxu0 0
        %1243 = vmatpush1.bf16.msra.mxu0 %v1226
        %1244 = vmatprep.subr.bf16.mxu0 0
        %1245 = vmatpush1.bf16.msra.mxu0 %v1227
        %1246 = vmatprep.subr.bf16.mxu0 0
        %1247 = vmatpush1.bf16.msra.mxu0 %v1228
        %1248 = vmatprep.subr.bf16.mxu0 0
        %1249 = vmatpush1.bf16.msra.mxu0 %v1229
        %1250 = vmatprep.subr.bf16.mxu0 0
        %1251 = vmatpush1.bf16.msra.mxu0 %v1230
        %1252 = vmatprep.subr.bf16.mxu0 0
        %1253 = vmatpush1.bf16.msra.mxu0 %v1231
        %1254 = vmatprep.subr.bf16.mxu0 0
        %1255 = vmatpush1.bf16.msra.mxu0 %v1232
        %1256 = vmatprep.subr.bf16.mxu0 0
        %1257 = vmatpush1.bf16.msra.mxu0 %v1233
        %1258 = vmatprep.subr.bf16.mxu0 0
        %1259 = vmatpush1.bf16.msra.mxu0 0
        %1260 = vmatprep.subr.bf16.mxu0 0
        %1261 = vmatpush1.bf16.msra.mxu0 0
        %1262 = vmatprep.subr.bf16.mxu0 0
        %1263 = vmatpush1.bf16.msra.mxu0 0
        %1264 = vmatprep.subr.bf16.mxu0 0
        %1265 = vmatpush1.bf16.msra.mxu0 0
        %1266 = vmatprep.subr.bf16.mxu0 0
        %1267 = vmatpush1.bf16.msra.mxu0 0
        %1268 = vmatprep.subr.bf16.mxu0 0
        %1269 = vmatpush1.bf16.msra.mxu0 0
        %1270 = vmatprep.subr.bf16.mxu0 0
        %1271 = vmatpush1.bf16.msra.mxu0 0
        %1272 = vmatprep.subr.bf16.mxu0 0
        %1273 = vmatpush1.bf16.msra.mxu0 0
        %1274 = vmatprep.mubr.bf16.mxu0 0
        %1275 = vmatmul.mubr.bf16.gmra.mrb[0].mxu0 %v1169
        %v1276 = vpop.f32.mrb[0].mxu0
        %v1277 = vadd.f32 0.0, %v1276
        %v1278 = vpop.f32.mrb[0].mxu0
        %v1279 = vpop.f32.mrb[0].mxu0
        %v1280 = vadd.f32 0.0, %v1279
        %v1281 = vpop.f32.mrb[0].mxu0
        %1282 = vmatprep.mubr.bf16.mxu0 0
        %1283 = vmatmul.mubr.bf16.gmra.mrb[0].mxu0 %v1170
        %v1284 = vpop.f32.mrb[0].mxu0
        %v1285 = vadd.f32 0.0, %v1284
        %v1286 = vpop.f32.mrb[0].mxu0
        %v1287 = vpop.f32.mrb[0].mxu0
        %v1288 = vadd.f32 0.0, %v1287
        %v1289 = vpop.f32.mrb[0].mxu0
        %1290 = vmatprep.mubr.bf16.mxu0 0
        %1291 = vmatmul.mubr.bf16.gmra.mrb[0].mxu0 %v1171
        %v1292 = vpop.f32.mrb[0].mxu0
        %v1293 = vadd.f32 0.0, %v1292
        %v1294 = vpop.f32.mrb[0].mxu0
        %v1295 = vpop.f32.mrb[0].mxu0
        %v1296 = vadd.f32 0.0, %v1295
        %v1297 = vpop.f32.mrb[0].mxu0
        %1298 = vmatprep.mubr.bf16.mxu0 0
        %1299 = vmatmul.mubr.bf16.gmra.mrb[0].mxu0 %v1172
        %v1300 = vpop.f32.mrb[0].mxu0
        %v1301 = vadd.f32 0.0, %v1300
        %v1302 = vpop.f32.mrb[0].mxu0
        %v1303 = vpop.f32.mrb[0].mxu0
        %v1304 = vadd.f32 0.0, %v1303
        %v1305 = vpop.f32.mrb[0].mxu0
        %1306 = vmatprep.mubr.bf16.mxu0 0
        %1307 = vmatmul.mubr.bf16.gmra.mrb[0].mxu0 %v1173
        %v1308 = vpop.f32.mrb[0].mxu0
        %v1309 = vadd.f32 0.0, %v1308
        %v1310 = vpop.f32.mrb[0].mxu0
        %v1311 = vpop.f32.mrb[0].mxu0
        %v1312 = vadd.f32 0.0, %v1311
        %v1313 = vpop.f32.mrb[0].mxu0
        %1314 = vmatprep.mubr.bf16.mxu0 0
        %1315 = vmatmul.mubr.bf16.gmra.mrb[0].mxu0 %v1174
        %v1316 = vpop.f32.mrb[0].mxu0
        %v1317 = vadd.f32 0.0, %v1316
        %v1318 = vpop.f32.mrb[0].mxu0
        %v1319 = vpop.f32.mrb[0].mxu0
        %v1320 = vadd.f32 0.0, %v1319
        %v1321 = vpop.f32.mrb[0].mxu0
        %1322 = vmatprep.mubr.bf16.mxu0 0
        %1323 = vmatmul.mubr.bf16.gmra.mrb[0].mxu0 %v1175
        %v1324 = vpop.f32.mrb[0].mxu0
        %v1325 = vadd.f32 0.0, %v1324
        %v1326 = vpop.f32.mrb[0].mxu0
        %v1327 = vpop.f32.mrb[0].mxu0
        %v1328 = vadd.f32 0.0, %v1327
        %v1329 = vpop.f32.mrb[0].mxu0
        %1330 = vmatprep.mubr.bf16.mxu0 0
        %1331 = vmatmul.mubr.bf16.gmra.mrb[0].mxu0 %v1176
        %v1332 = vpop.f32.mrb[0].mxu0
        %v1333 = vadd.f32 0.0, %v1332
        %v1334 = vpop.f32.mrb[0].mxu0
        %v1335 = vpop.f32.mrb[0].mxu0
        %v1336 = vadd.f32 0.0, %v1335
        %v1337 = vpop.f32.mrb[0].mxu0
        %1338 = vdwg.mxu0
        %v1339 = vpack.c.bf16 %v1280, %v1277
        %v1340 = vpack.c.bf16 %v1288, %v1285
        %v1341 = vpack.c.bf16 %v1296, %v1293
        %v1342 = vpack.c.bf16 %v1304, %v1301
        %v1343 = vpack.c.bf16 %v1312, %v1309
        %v1344 = vpack.c.bf16 %v1320, %v1317
        %v1345 = vpack.c.bf16 %v1328, %v1325
        %v1346 = vpack.c.bf16 %v1336, %v1333
        %v1347 = vlaneseq
        %v1348 = vshrl.u32 %v1347, 7
        %v1349 = vsub.s32 3, %v1348
        %v1350 = vrot.slane %v350, %v1349
        %1351 = vmatprep.subr.bf16.mxu0 0
        %1352 = vmatpush1.bf16.msra.mxu0 %v1339
        %1353 = vmatprep.subr.bf16.mxu0 0
        %1354 = vmatpush1.bf16.msra.mxu0 %v1340
        %1355 = vmatprep.subr.bf16.mxu0 0
        %1356 = vmatpush1.bf16.msra.mxu0 %v1341
        %1357 = vmatprep.subr.bf16.mxu0 0
        %1358 = vmatpush1.bf16.msra.mxu0 %v1342
        %1359 = vmatprep.subr.bf16.mxu0 0
        %1360 = vmatpush1.bf16.msra.mxu0 %v1343
        %1361 = vmatprep.subr.bf16.mxu0 0
        %1362 = vmatpush1.bf16.msra.mxu0 %v1344
        %1363 = vmatprep.subr.bf16.mxu0 0
        %1364 = vmatpush1.bf16.msra.mxu0 %v1345
        %1365 = vmatprep.subr.bf16.mxu0 0
        %1366 = vmatpush1.bf16.msra.mxu0 %v1346
        %1367 = vmatprep.subr.bf16.mxu0 0
        %1368 = vmatpush1.bf16.msra.mxu0 0
        %1369 = vmatprep.subr.bf16.mxu0 0
        %1370 = vmatpush1.bf16.msra.mxu0 0
        %1371 = vmatprep.subr.bf16.mxu0 0
        %1372 = vmatpush1.bf16.msra.mxu0 0
        %1373 = vmatprep.subr.bf16.mxu0 0
        %1374 = vmatpush1.bf16.msra.mxu0 0
        %1375 = vmatprep.subr.bf16.mxu0 0
        %1376 = vmatpush1.bf16.msra.mxu0 0
        %1377 = vmatprep.subr.bf16.mxu0 0
        %1378 = vmatpush1.bf16.msra.mxu0 0
        %1379 = vmatprep.subr.bf16.mxu0 0
        %1380 = vmatpush1.bf16.msra.mxu0 0
        %1381 = vmatprep.subr.bf16.mxu0 0
        %1382 = vmatpush1.bf16.msra.mxu0 0
        %1383 = vmatprep.mubr.bf16.mxu0 0
        %1384 = vmatmul.mubr.bf16.gmra.mrb[0].mxu0 %v403
        %v1385 = vpop.f32.mrb[0].mxu0
        %v1386 = vadd.f32 %v1350, %v1385
        %v1387 = vpop.f32.mrb[0].mxu0
        %v1388 = vpop.f32.mrb[0].mxu0
        %v1389 = vadd.f32 %v1350, %v1388
        %v1390 = vpop.f32.mrb[0].mxu0
        %1391 = vmatprep.mubr.bf16.mxu0 0
        %1392 = vmatmul.mubr.bf16.gmra.mrb[0].mxu0 %v404
        %v1393 = vpop.f32.mrb[0].mxu0
        %v1394 = vadd.f32 %v1350, %v1393
        %v1395 = vpop.f32.mrb[0].mxu0
        %v1396 = vpop.f32.mrb[0].mxu0
        %v1397 = vadd.f32 %v1350, %v1396
        %v1398 = vpop.f32.mrb[0].mxu0
        %1399 = vmatprep.mubr.bf16.mxu0 0
        %1400 = vmatmul.mubr.bf16.gmra.mrb[0].mxu0 %v405
        %v1401 = vpop.f32.mrb[0].mxu0
        %v1402 = vadd.f32 %v1350, %v1401
        %v1403 = vpop.f32.mrb[0].mxu0
        %v1404 = vpop.f32.mrb[0].mxu0
        %v1405 = vadd.f32 %v1350, %v1404
        %v1406 = vpop.f32.mrb[0].mxu0
        %1407 = vmatprep.mubr.bf16.mxu0 0
        %1408 = vmatmul.mubr.bf16.gmra.mrb[0].mxu0 %v406
        %v1409 = vpop.f32.mrb[0].mxu0
        %v1410 = vadd.f32 %v1350, %v1409
        %v1411 = vpop.f32.mrb[0].mxu0
        %v1412 = vpop.f32.mrb[0].mxu0
        %v1413 = vadd.f32 %v1350, %v1412
        %v1414 = vpop.f32.mrb[0].mxu0
        %1415 = vmatprep.mubr.bf16.mxu0 0
        %1416 = vmatmul.mubr.bf16.gmra.mrb[0].mxu0 %v407
        %v1417 = vpop.f32.mrb[0].mxu0
        %v1418 = vadd.f32 %v1350, %v1417
        %v1419 = vpop.f32.mrb[0].mxu0
        %v1420 = vpop.f32.mrb[0].mxu0
        %v1421 = vadd.f32 %v1350, %v1420
        %v1422 = vpop.f32.mrb[0].mxu0
        %1423 = vmatprep.mubr.bf16.mxu0 0
        %1424 = vmatmul.mubr.bf16.gmra.mrb[0].mxu0 %v408
        %v1425 = vpop.f32.mrb[0].mxu0
        %v1426 = vadd.f32 %v1350, %v1425
        %v1427 = vpop.f32.mrb[0].mxu0
        %v1428 = vpop.f32.mrb[0].mxu0
        %v1429 = vadd.f32 %v1350, %v1428
        %v1430 = vpop.f32.mrb[0].mxu0
        %1431 = vmatprep.mubr.bf16.mxu0 0
        %1432 = vmatmul.mubr.bf16.gmra.mrb[0].mxu0 %v409
        %v1433 = vpop.f32.mrb[0].mxu0
        %v1434 = vadd.f32 %v1350, %v1433
        %v1435 = vpop.f32.mrb[0].mxu0
        %v1436 = vpop.f32.mrb[0].mxu0
        %v1437 = vadd.f32 %v1350, %v1436
        %v1438 = vpop.f32.mrb[0].mxu0
        %1439 = vmatprep.mubr.bf16.mxu0 0
        %1440 = vmatmul.mubr.bf16.gmra.mrb[0].mxu0 %v410
        %v1441 = vpop.f32.mrb[0].mxu0
        %v1442 = vadd.f32 %v1350, %v1441
        %v1443 = vpop.f32.mrb[0].mxu0
        %v1444 = vpop.f32.mrb[0].mxu0
        %v1445 = vadd.f32 %v1350, %v1444
        %v1446 = vpop.f32.mrb[0].mxu0
        %1447 = vdwg.mxu0
        %v1448 = vmax.f32 %v1386, 0.0
        %v1449 = vmax.f32 %v1389, 0.0
        %v1450 = vmax.f32 %v1394, 0.0
        %v1451 = vmax.f32 %v1397, 0.0
        %v1452 = vmax.f32 %v1402, 0.0
        %v1453 = vmax.f32 %v1405, 0.0
        %v1454 = vmax.f32 %v1410, 0.0
        %v1455 = vmax.f32 %v1413, 0.0
        %v1456 = vmax.f32 %v1418, 0.0
        %v1457 = vmax.f32 %v1421, 0.0
        %v1458 = vmax.f32 %v1426, 0.0
        %v1459 = vmax.f32 %v1429, 0.0
        %v1460 = vmax.f32 %v1434, 0.0
        %v1461 = vmax.f32 %v1437, 0.0
        %v1462 = vmax.f32 %v1442, 0.0
        %v1463 = vmax.f32 %v1445, 0.0
        %v1464 = vld [vmem:[%s291] sm:$0xff]
        %v1465 = vpack.c.bf16 %v1464, %v1464
        %v1466 = vpack.c.bf16 %v1449, %v1448
        %v1467 = vpack.c.bf16 %v1451, %v1450
        %v1468 = vpack.c.bf16 %v1453, %v1452
        %v1469 = vpack.c.bf16 %v1455, %v1454
        %v1470 = vpack.c.bf16 %v1457, %v1456
        %v1471 = vpack.c.bf16 %v1459, %v1458
        %v1472 = vpack.c.bf16 %v1461, %v1460
        %v1473 = vpack.c.bf16 %v1463, %v1462
        %1474 = vmatprep.subr.bf16.mxu0 0
        %1475 = vmatpush1.bf16.msra.mxu0 %v1466
        %1476 = vmatprep.subr.bf16.mxu0 0
        %1477 = vmatpush1.bf16.msra.mxu0 %v1467
        %1478 = vmatprep.subr.bf16.mxu0 0
        %1479 = vmatpush1.bf16.msra.mxu0 %v1468
        %1480 = vmatprep.subr.bf16.mxu0 0
        %1481 = vmatpush1.bf16.msra.mxu0 %v1469
        %1482 = vmatprep.subr.bf16.mxu0 0
        %1483 = vmatpush1.bf16.msra.mxu0 %v1470
        %1484 = vmatprep.subr.bf16.mxu0 0
        %1485 = vmatpush1.bf16.msra.mxu0 %v1471
        %1486 = vmatprep.subr.bf16.mxu0 0
        %1487 = vmatpush1.bf16.msra.mxu0 %v1472
        %1488 = vmatprep.subr.bf16.mxu0 0
        %1489 = vmatpush1.bf16.msra.mxu0 %v1473
        %1490 = vmatprep.subr.bf16.mxu0 0
        %1491 = vmatpush1.bf16.msra.mxu0 0
        %1492 = vmatprep.subr.bf16.mxu0 0
        %1493 = vmatpush1.bf16.msra.mxu0 0
        %1494 = vmatprep.subr.bf16.mxu0 0
        %1495 = vmatpush1.bf16.msra.mxu0 0
        %1496 = vmatprep.subr.bf16.mxu0 0
        %1497 = vmatpush1.bf16.msra.mxu0 0
        %1498 = vmatprep.subr.bf16.mxu0 0
        %1499 = vmatpush1.bf16.msra.mxu0 0
        %1500 = vmatprep.subr.bf16.mxu0 0
        %1501 = vmatpush1.bf16.msra.mxu0 0
        %1502 = vmatprep.subr.bf16.mxu0 0
        %1503 = vmatpush1.bf16.msra.mxu0 0
        %1504 = vmatprep.subr.bf16.mxu0 0
        %1505 = vmatpush1.bf16.msra.mxu0 0
        %1506 = vmatprep.mubr.bf16.mxu0 0
        %1507 = vmatmul.mubr.bf16.gmra.mrb[0].mxu0 %v1465
        %v1508 = vpop.f32.mrb[0].mxu0
        %v1509 = vadd.f32 0.0, %v1508
        %v1510 = vpop.f32.mrb[0].mxu0
        %v1511 = vpop.f32.mrb[0].mxu0
        %v1512 = vpop.f32.mrb[0].mxu0
        %1513 = vdwg.mxu0
        %v1514 = vpack.c.bf16 %v1509, %v1509
        %s1515 = scalar_lea.vmem [#allocation8], 192
        %v1516 = vld [vmem:[%s1515] sm:$0xf]
        %v1517 = vld [vmem:[%s1515 + $0x4] sm:$0xf]
        %v1518 = vld [vmem:[%s1515 + $0x8] sm:$0xf]
        %v1519 = vld [vmem:[%s1515 + $0xc] sm:$0xf]
        %v1520 = vld [vmem:[%s1515 + $0x10] sm:$0xf]
        %v1521 = vld [vmem:[%s1515 + $0x14] sm:$0xf]
        %v1522 = vld [vmem:[%s1515 + $0x18] sm:$0xf]
        %v1523 = vld [vmem:[%s1515 + $0x1c] sm:$0xf]
        %v1524 = vld [vmem:[%s1515 + $0x20] sm:$0xf]
        %v1525 = vld [vmem:[%s1515 + $0x24] sm:$0xf]
        %v1526 = vld [vmem:[%s1515 + $0x28] sm:$0xf]
        %v1527 = vld [vmem:[%s1515 + $0x2c] sm:$0xf]
        %v1528 = vld [vmem:[%s1515 + $0x30] sm:$0xf]
        %v1529 = vld [vmem:[%s1515 + $0x34] sm:$0xf]
        %v1530 = vld [vmem:[%s1515 + $0x38] sm:$0xf]
        %v1531 = vld [vmem:[%s1515 + $0x3c] sm:$0xf]
        %v1532 = vlaneseq
        %v1533 = vshrl.u32 %v1532, 7
        %v1534 = vsub.s32 4, %v1533
        %v1535 = vrot.slane %v350, %v1534
        %v1552 = vunpack.c.l.b16 %v1516
        %v1553 = vunpack.c.l.b16 %v1517
        %v1554 = vunpack.c.l.b16 %v1518
        %v1555 = vunpack.c.l.b16 %v1519
        %v1556 = vunpack.c.l.b16 %v1520
        %v1557 = vunpack.c.l.b16 %v1521
        %v1558 = vunpack.c.l.b16 %v1522
        %v1559 = vunpack.c.l.b16 %v1523
        %v1560 = vunpack.c.l.b16 %v1524
        %v1561 = vunpack.c.l.b16 %v1525
        %v1562 = vunpack.c.l.b16 %v1526
        %v1563 = vunpack.c.l.b16 %v1527
        %v1564 = vunpack.c.l.b16 %v1528
        %v1565 = vunpack.c.l.b16 %v1529
        %v1566 = vunpack.c.l.b16 %v1530
        %v1567 = vunpack.c.l.b16 %v1531
        %v1568 = vpack.c.b16 %v1553, %v1552
        %v1569 = vpack.c.b16 %v1555, %v1554
        %v1570 = vpack.c.b16 %v1557, %v1556
        %v1571 = vpack.c.b16 %v1559, %v1558
        %v1572 = vpack.c.b16 %v1561, %v1560
        %v1573 = vpack.c.b16 %v1563, %v1562
        %v1574 = vpack.c.b16 %v1565, %v1564
        %v1575 = vpack.c.b16 %v1567, %v1566
        %1584 = vmatprep.subr.bf16.mxu0 0
        %1585 = vmatpush1.bf16.msra.mxu0 %v1568
        %1586 = vmatprep.subr.bf16.mxu0 0
        %1587 = vmatpush1.bf16.msra.mxu0 %v1569
        %1588 = vmatprep.subr.bf16.mxu0 0
        %1589 = vmatpush1.bf16.msra.mxu0 %v1570
        %1590 = vmatprep.subr.bf16.mxu0 0
        %1591 = vmatpush1.bf16.msra.mxu0 %v1571
        %1592 = vmatprep.subr.bf16.mxu0 0
        %1593 = vmatpush1.bf16.msra.mxu0 %v1572
        %1594 = vmatprep.subr.bf16.mxu0 0
        %1595 = vmatpush1.bf16.msra.mxu0 %v1573
        %1596 = vmatprep.subr.bf16.mxu0 0
        %1597 = vmatpush1.bf16.msra.mxu0 %v1574
        %1598 = vmatprep.subr.bf16.mxu0 0
        %1599 = vmatpush1.bf16.msra.mxu0 %v1575
        %1600 = vmatprep.subr.bf16.mxu0 0
        %1601 = vmatpush1.bf16.msra.mxu0 0
        %1602 = vmatprep.subr.bf16.mxu0 0
        %1603 = vmatpush1.bf16.msra.mxu0 0
        %1604 = vmatprep.subr.bf16.mxu0 0
        %1605 = vmatpush1.bf16.msra.mxu0 0
        %1606 = vmatprep.subr.bf16.mxu0 0
        %1607 = vmatpush1.bf16.msra.mxu0 0
        %1608 = vmatprep.subr.bf16.mxu0 0
        %1609 = vmatpush1.bf16.msra.mxu0 0
        %1610 = vmatprep.subr.bf16.mxu0 0
        %1611 = vmatpush1.bf16.msra.mxu0 0
        %1612 = vmatprep.subr.bf16.mxu0 0
        %1613 = vmatpush1.bf16.msra.mxu0 0
        %1614 = vmatprep.subr.bf16.mxu0 0
        %1615 = vmatpush1.bf16.msra.mxu0 0
        %1616 = vmatprep.mubr.bf16.mxu0 0
        %1617 = vmatmul.mubr.bf16.gmra.mrb[0].mxu0 %v1514
        %v1618 = vpop.f32.mrb[0].mxu0
        %v1619 = vadd.f32 %v1535, %v1618
        %v1620 = vpop.f32.mrb[0].mxu0
        %v1621 = vpop.f32.mrb[0].mxu0
        %v1622 = vpop.f32.mrb[0].mxu0
        %1623 = vdwg.mxu0
        %1624 = vst [vmem:[%s331] sm:$0xff] %v1619
        %s1625 = sand.u32 %s154, 1
        %s1626 = scalar_lea.sflag [#allocation4], %s1625
        %s1627 = sand.u32 %s154, 1
        %s1628 = smul.addr %s1627, 8
        %s1629 = scalar_lea.vmem [#allocation10], %s1628
        // Predicated region
        $region57: #{tpu_custom_call.1} parent=39 // pred_check
          %p1630 = pneg %p164
        $region58: #{tpu_custom_call.1} parent=39 // pred_check_branch
          %1632 = sbr.rel (%p1630) target = $region60
        $region59: #{tpu_custom_call.1} parent=39 // pred_region
          %s1634 = ssub.s32 128, 128
          %1635 = vsyncadd %s1626, %s1634
          %s1636 = smul.addr %s26, 128
          %s1637 = scalar_lea.hbm %s5, %s1636
          %s1639 = sshll.u32 %s1629, 4
          %s1640 = int_to_ptr.vmem [resolvable:$true] %s1639
          %1642 = dma.vmem_to_hbm [thread:$0]  %s1640, 128, %s1637, %s1626
        $region60: #{tpu_custom_call.1} parent=39 // pred_fallthru
          _
      $region40: #{tpu_custom_call.1} parent=5 // pred_fallthru
        _
      %p1643 = scmp.le.s32.totalorder 2, %s21
      // Predicated region
      $region61: #{tpu_custom_call.1} parent=5 // pred_check
        %p1644 = pneg %p1643
      $region62: #{tpu_custom_call.1} parent=5 // pred_check_branch
        %1646 = sbr.rel (%p1644) target = $region64
      $region63: #{tpu_custom_call.1} parent=5 // pred_region
        %s1647 = ssub.s32 %s21, 2
        // Predicated region
        $region65: #{tpu_custom_call.1} parent=63 // pred_check
          %p1648 = pneg %p170
        $region66: #{tpu_custom_call.1} parent=63 // pred_check_branch
          %1650 = sbr.rel (%p1648) target = $region68
        $region67: #{tpu_custom_call.1} parent=63 // pred_region
          %s1651 = sand.u32 %s155, 1
          %s1652 = scalar_lea.sflag [#allocation4], %s1651
          %s1653 = sand.u32 %s155, 1
          %s1654 = smul.addr %s1653, 8
          %s1655 = scalar_lea.vmem [#allocation10], %s1654
          %1656 = dma.done %s1652, 128
        $region68: #{tpu_custom_call.1} parent=63 // pred_fallthru
          _
      $region64: #{tpu_custom_call.1} parent=5 // pred_fallthru
        _
    $region6: #{tpu_custom_call.1} parent=1 // loop_footer
      %s25 = sadd.s32 1, %s21
    $region7: #{tpu_custom_call.1} parent=1 // loop_footer_branch
      %20 = sbr.rel target = $region3
    $region8: #{tpu_custom_call.1} parent=1 // loop_exit
      _
    %1657 = vsyncpa [#allocation3], 1
    %s1658 = scalar_lea.sflag [#allocation3], 1
    %1659 = vsyncpa %s1658, 1
    %1660 = vsyncpa [#allocation6], 1
    %s1661 = scalar_lea.sflag [#allocation6], 1
    %1662 = vsyncpa %s1661, 1
    %1663 = vsyncpa [#allocation9], 1
    %1664 = vsyncpa [#allocation4], 1
    %s1665 = scalar_lea.sflag [#allocation4], 1
    %1666 = vsyncpa %s1665, 1

</llo_original>
